<compile_context>
chip_gen: v7x
topology: tpu7x:2x2x1
jax: 0.10.0
libtpu: 0.0.40
codegen_flags: <defaults>
</compile_context>

<pallas_src>
import functools

import jax
import jax.numpy as jnp
from jax.experimental import pallas as pl
from jax.experimental.pallas import tpu as pltpu


# --------------------------------------------------------------------------- #
# Kernels
# --------------------------------------------------------------------------- #
def _bilstm_tanh(x, w_gates, b_gates, hp):
    """Fused single-step bi-LSTM + tanh.  Returns (TN, HP) float32.

    Gate columns are laid out [i_f|i_b|pad , g_f|g_b|pad , o_f|o_b|pad], each
    block HP lanes wide.  Padded lanes give i=0.5, g=0 -> h=0 exactly, so the
    downstream projection (whose padded rows are zero) is unaffected.
    NOTE: valid only because seq_len == 1 and h0 = c0 = 0 (forget gate dead).
    """
    gates = jnp.dot(x, w_gates, preferred_element_type=jnp.float32) + b_gates
    i = jax.nn.sigmoid(gates[:, 0 * hp:1 * hp])          # [i_fwd | i_bwd | pad]
    g = jnp.tanh(gates[:, 1 * hp:2 * hp])                # [g_fwd | g_bwd | pad]
    o = jax.nn.sigmoid(gates[:, 2 * hp:3 * hp])          # [o_fwd | o_bwd | pad]
    return jnp.tanh(o * jnp.tanh(i * g))                 # tanh(concat(h_f, h_b))


def postagger_eval_kernel(x_ref, wg_ref, bg_ref, wcat_ref, bcat_ref, res_ref,
                          *, hp):
    dot_dt = wg_ref.dtype
    h = _bilstm_tanh(x_ref[...].astype(dot_dt), wg_ref[...], bg_ref[...], hp)
    res = jnp.dot(h.astype(dot_dt), wcat_ref[...],
                  preferred_element_type=jnp.float32)
    res_ref[...] = (res + bcat_ref[...]).astype(res_ref.dtype)


def postagger_train_prng_kernel(seed_ref, x_ref, wg_ref, bg_ref, wcat_ref,
                                bcat_ref, wn_ref, res_ref, *, hp, noise_sd):
    """Train path with in-kernel Gaussian noise (no noise HBM traffic)."""
    pltpu.prng_seed(seed_ref[0] + pl.program_id(0) * 1000003)
    dot_dt = wg_ref.dtype
    tn = x_ref.shape[0]
    # input noise (combined_reps + randn * noise_sd), added in f32
    n_in = pltpu.stateful_normal(x_ref.shape, jnp.float32) * noise_sd
    x = (x_ref[...].astype(jnp.float32) + n_in).astype(dot_dt)
    h = _bilstm_tanh(x, wg_ref[...], bg_ref[...], hp)            # (TN, HP) f32
    # fused lane-dense projection: [rval | rval_freq_bin | 0-pad]
    res = jnp.dot(h.astype(dot_dt), wcat_ref[...],
                  preferred_element_type=jnp.float32)
    # exact per-projection output noise via block-diagonal noise weights
    n_proj = (pltpu.stateful_normal((tn, 2 * hp), jnp.float32)
              * noise_sd).astype(dot_dt)
    res = res + jnp.dot(n_proj, wn_ref[...], preferred_element_type=jnp.float32)
    res_ref[...] = (res + bcat_ref[...]).astype(res_ref.dtype)


def postagger_train_streamed_kernel(x_ref, n1_ref, n23_ref, wg_ref, bg_ref,
                                    wcat_ref, bcat_ref, wn_ref, res_ref, *, hp):
    """Fallback train path: noise pre-generated in HBM (previous verified path)."""
    dot_dt = wg_ref.dtype
    x = (x_ref[...].astype(jnp.float32) +
         n1_ref[...].astype(jnp.float32)).astype(dot_dt)
    h = _bilstm_tanh(x, wg_ref[...], bg_ref[...], hp)
    res = jnp.dot(h.astype(dot_dt), wcat_ref[...],
                  preferred_element_type=jnp.float32)
    res = res + jnp.dot(n23_ref[...], wn_ref[...],
                        preferred_element_type=jnp.float32)
    res_ref[...] = (res + bcat_ref[...]).astype(res_ref.dtype)


# --------------------------------------------------------------------------- #
# Parameters / wrapper
# --------------------------------------------------------------------------- #
def _round_up(x, m):
    return (x + m - 1) // m * m


def _pad_rows(a, n_pad):
    n = a.shape[0]
    if n == n_pad:
        return a
    return jnp.pad(a, ((0, n_pad - n), (0, 0)))


def init_params(key, *, n_word_embeddings, word_embedding_dim, hidden_size,
                n_out, n_freq_bins):
    ks = jax.random.split(key, 16)
    scale = 1.0 / jnp.sqrt(hidden_size)

    def unif(k, shape):
        return jax.random.uniform(k, shape, jnp.float32, -scale, scale)

    H4 = 4 * hidden_size
    return {
        'hidden': hidden_size,
        'word_emb': jax.random.normal(ks[0], (n_word_embeddings, word_embedding_dim),
                                      jnp.float32),
        # main bi-LSTM (PyTorch layout: (4H, E), gate order i, f, g, o)
        'w_ih_f': unif(ks[1], (H4, word_embedding_dim)),
        'b_ih_f': unif(ks[2], (H4,)),
        'b_hh_f': unif(ks[3], (H4,)),
        'w_ih_b': unif(ks[4], (H4, word_embedding_dim)),
        'b_ih_b': unif(ks[5], (H4,)),
        'b_hh_b': unif(ks[6], (H4,)),
        # output projections
        'w_out': unif(ks[7], (n_out, 2 * hidden_size)),
        'b_out': unif(ks[8], (n_out,)),
        'w_fb': unif(ks[9], (n_freq_bins, 2 * hidden_size)),
        'b_fb': unif(ks[10], (n_freq_bins,)),
    }


def pos_tagger_forward(params, tokens, noise_key=None, *, return_freq_bins=True,
                       train=True, noise_sd=0.1, tile_n=1024,
                       matmul_dtype=jnp.bfloat16, out_dtype=jnp.float32,
                       inkernel_noise=True):
    H = params['hidden']
    H2 = 2 * H
    # ---- glue: embedding gather stays in JAX (E*4B = 128 B rows is too small
    #      for an efficient in-kernel row-gather DMA) ----
    x = params['word_emb'][tokens].astype(jnp.float32)             # (N, E)
    N, E = x.shape
    n_out = params['w_out'].shape[0]
    n_fb = params['w_fb'].shape[0]

    HP = _round_up(H2, 128)                 # lane-aligned per-gate block width
    P = _round_up(n_out + n_fb, 128)        # lane-aligned fused output width

    # ---- fused / pruned gate weights (forget gate dropped: c0 == 0) ----
    def igo(w):                                   # rows of i, g, o gates
        return w[0:H], w[2 * H:3 * H], w[3 * H:4 * H]

    wi_f, wg_f, wo_f = igo(params['w_ih_f'])
    wi_b, wg_b, wo_b = igo(params['w_ih_b'])
    bi_f, bg_f, bo_f = igo(params['b_ih_f'] + params['b_hh_f'])
    bi_b, bg_b, bo_b = igo(params['b_ih_b'] + params['b_hh_b'])

    # gate blocks [i_f|i_b|0 , g_f|g_b|0 , o_f|o_b|0], each HP lanes wide
    w_gates = jnp.zeros((E, 3 * HP), jnp.float32)
    b_gates = jnp.zeros((1, 3 * HP), jnp.float32)
    gate_blocks = [
        (jnp.concatenate([wi_f, wi_b], axis=0), jnp.concatenate([bi_f, bi_b])),
        (jnp.concatenate([wg_f, wg_b], axis=0), jnp.concatenate([bg_f, bg_b])),
        (jnp.concatenate([wo_f, wo_b], axis=0), jnp.concatenate([bo_f, bo_b])),
    ]
    for blk, (w, b) in enumerate(gate_blocks):
        w_gates = w_gates.at[:, blk * HP: blk * HP + H2].set(w.T)
        b_gates = b_gates.at[0, blk * HP: blk * HP + H2].set(b)

    # ---- fused lane-dense output projection: [rval | rval_freq_bin | pad] ----
    wout_t = params['w_out'].T                    # (2H, n_out)
    wfb_t = params['w_fb'].T                      # (2H, n_fb)
    w_cat = jnp.zeros((HP, P), jnp.float32)
    w_cat = w_cat.at[:H2, :n_out].set(wout_t).at[:H2, n_out:n_out + n_fb].set(wfb_t)
    b_cat = jnp.zeros((1, P), jnp.float32)
    b_cat = b_cat.at[0, :n_out].set(params['b_out'])
    b_cat = b_cat.at[0, n_out:n_out + n_fb].set(params['b_fb'])

    # ---- token tiling: multiples of 256 (fat DMAs, amortized grid-step cost,
    #      satisfies every packed-dtype sublane multiple); keep >= 2 grid steps
    #      for large N so v7x megacore can shard the "parallel" axis ----
    TN = _round_up(min(tile_n, max(N, 1)), 256)
    if N >= 512:
        TN = min(TN, _round_up((N + 1) // 2, 256))
    N_pad = _round_up(N, TN)
    grid = (N_pad // TN,)

    x = _pad_rows(x, N_pad).astype(matmul_dtype)
    w_gates_c = w_gates.astype(matmul_dtype)
    w_cat_c = w_cat.astype(matmul_dtype)

    row_map = lambda i, *_: (i, 0)        # noqa: E731  (works w/ & w/o prefetch)
    res_map = lambda i, *_: (0, 0)        # noqa: E731

    def row_spec(width):
        return pl.BlockSpec((TN, width), row_map)

    def resident(arr):
        return pl.BlockSpec(arr.shape, res_map)

    out_spec = pl.BlockSpec((TN, P), row_map)
    out_shape = jax.ShapeDtypeStruct((N_pad, P), out_dtype)
    cparams = pltpu.CompilerParams(dimension_semantics=("parallel",))

    isz = jnp.dtype(matmul_dtype).itemsize
    osz = jnp.dtype(out_dtype).itemsize
    base_flops = 2 * N_pad * (E * 3 * HP + HP * P)
    base_trans = 5 * N_pad * HP
    base_bytes = (N_pad * E * isz + N_pad * P * osz
                  + (w_gates_c.size + w_cat_c.size) * isz
                  + (b_gates.size + b_cat.size) * 4)

    if train and noise_sd != 0.0:
        if noise_key is None:             # guard: never crash on missing key
            noise_key = jax.random.PRNGKey(0)
        # block-diagonal projection of the two independent output noises
        w_noise = jnp.zeros((2 * HP, P), jnp.float32)
        w_noise = w_noise.at[:H2, :n_out].set(wout_t)
        w_noise = w_noise.at[HP:HP + H2, n_out:n_out + n_fb].set(wfb_t)
        w_noise_c = w_noise.astype(matmul_dtype)
        ce = pl.CostEstimate(
            flops=base_flops + 2 * N_pad * (2 * HP) * P,
            transcendentals=base_trans + N_pad * (E + 2 * HP),
            bytes_accessed=base_bytes + int(w_noise_c.size) * isz)

        res = None
        if inkernel_noise:
            try:
                seed = jax.random.randint(noise_key, (1,), 0,
                                          jnp.iinfo(jnp.int32).max,
                                          dtype=jnp.int32)
                kern = functools.partial(postagger_train_prng_kernel,
                                         hp=HP, noise_sd=float(noise_sd))
                res = pl.pallas_call(
                    kern,
                    out_shape=out_shape,
                    grid_spec=pltpu.PrefetchScalarGridSpec(
                        num_scalar_prefetch=1,
                        grid=grid,
                        in_specs=[row_spec(E),
                                  resident(w_gates_c), resident(b_gates),
                                  resident(w_cat_c), resident(b_cat),
                                  resident(w_noise_c)],
                        out_specs=out_spec),
                    compiler_params=cparams,
                    cost_estimate=ce,
                )(seed, x, w_gates_c, b_gates, w_cat_c, b_cat, w_noise_c)
                res = jax.block_until_ready(res)
            except Exception:             # in-kernel PRNG unavailable -> fallback
                res = None

        if res is None:
            # fallback: HBM-streamed jax.random noise (previously verified path)
            k1, k2, k3 = jax.random.split(noise_key, 3)
            n1 = jax.random.normal(k1, (N, E), jnp.float32) * noise_sd
            n23 = jnp.zeros((N, 2 * HP), jnp.float32)
            n23 = n23.at[:, :H2].set(
                jax.random.normal(k2, (N, H2), jnp.float32) * noise_sd)
            n23 = n23.at[:, HP:HP + H2].set(
                jax.random.normal(k3, (N, H2), jnp.float32) * noise_sd)
            n1 = _pad_rows(n1, N_pad).astype(matmul_dtype)
            n23 = _pad_rows(n23, N_pad).astype(matmul_dtype)
            kern = functools.partial(postagger_train_streamed_kernel, hp=HP)
            res = pl.pallas_call(
                kern,
                out_shape=out_shape,
                grid=grid,
                in_specs=[row_spec(E), row_spec(E), row_spec(2 * HP),
                          resident(w_gates_c), resident(b_gates),
                          resident(w_cat_c), resident(b_cat),
                          resident(w_noise_c)],
                out_specs=out_spec,
                compiler_params=cparams,
                cost_estimate=ce,
            )(x, n1, n23, w_gates_c, b_gates, w_cat_c, b_cat, w_noise_c)
    else:
        # inference path: no noise inputs at all
        ce = pl.CostEstimate(flops=base_flops, transcendentals=base_trans,
                             bytes_accessed=base_bytes)
        kern = functools.partial(postagger_eval_kernel, hp=HP)
        res = pl.pallas_call(
            kern,
            out_shape=out_shape,
            grid=grid,
            in_specs=[row_spec(E), resident(w_gates_c), resident(b_gates),
                      resident(w_cat_c), resident(b_cat)],
            out_specs=out_spec,
            compiler_params=cparams,
            cost_estimate=ce,
        )(x, w_gates_c, b_gates, w_cat_c, b_cat)

    # PyTorch: output.permute(1, 0, 2) -> (N, seq_len=1, ·)
    rval = res[:N, None, :n_out]
    rfb = res[:N, None, n_out:n_out + n_fb]
    if not return_freq_bins:
        return rval
    return rval, rfb


# --------------------------------------------------------------------------- #
# Pure-JAX reference (closed form of the PyTorch forward, train=False)
# --------------------------------------------------------------------------- #
def reference_forward(params, tokens):
    H = params['hidden']
    x = params['word_emb'][tokens]

    def direction(w_ih, b_ih, b_hh):
        gates = x @ w_ih.T + b_ih + b_hh
        i = jax.nn.sigmoid(gates[:, 0:H])
        g = jnp.tanh(gates[:, 2 * H:3 * H])
        o = jax.nn.sigmoid(gates[:, 3 * H:4 * H])
        return o * jnp.tanh(i * g)

    h = jnp.concatenate(
        [direction(params['w_ih_f'], params['b_ih_f'], params['b_hh_f']),
         direction(params['w_ih_b'], params['b_ih_b'], params['b_hh_b'])],
        axis=-1)
    out = jnp.tanh(h)
    rval = out @ params['w_out'].T + params['b_out']
    rfb = out @ params['w_fb'].T + params['b_fb']
    return rval[:, None, :], rfb[:, None, :]


if __name__ == "__main__":
    # small config: use_word=True, use_char=False, use_byte=False
    # TODO(synk): char/byte sub-token bi-LSTM branches (true multi-step
    # recurrences over pad_sequence'd char/byte ids) are not implemented;
    # this script uses the use_char=False / use_byte=False configuration.
    N_TOKENS = 8
    N_WORD_EMBEDDINGS = 64
    WORD_EMBEDDING_DIM = 32
    HIDDEN_SIZE = 32
    N_OUT = 16
    N_FREQ_BINS = 8
    NOISE_SD = 0.1

    root = jax.random.PRNGKey(0)
    k_param, k_tok, k_tok2, k_noise = jax.random.split(root, 4)

    params = init_params(k_param,
                         n_word_embeddings=N_WORD_EMBEDDINGS,
                         word_embedding_dim=WORD_EMBEDDING_DIM,
                         hidden_size=HIDDEN_SIZE,
                         n_out=N_OUT,
                         n_freq_bins=N_FREQ_BINS)

    tokens = jax.random.randint(k_tok, (N_TOKENS,), 0, N_WORD_EMBEDDINGS)

    # --- eval path, f32 operands: exact check vs the pure-JAX reference ---
    rval_e, rfb_e = pos_tagger_forward(params, tokens, None,
                                       return_freq_bins=True, train=False,
                                       noise_sd=NOISE_SD,
                                       matmul_dtype=jnp.float32)
    jax.block_until_ready((rval_e, rfb_e))
    rval_ref, rfb_ref = reference_forward(params, tokens)
    assert rval_e.shape == (N_TOKENS, 1, N_OUT)
    assert rfb_e.shape == (N_TOKENS, 1, N_FREQ_BINS)
    assert bool(jnp.allclose(rval_e, rval_ref, atol=1e-5, rtol=1e-5))
    assert bool(jnp.allclose(rfb_e, rfb_ref, atol=1e-5, rtol=1e-5))

    # --- eval path, default bf16 operands (f32 accumulation): loose check ---
    rval_b, rfb_b = pos_tagger_forward(params, tokens, None,
                                       return_freq_bins=True, train=False,
                                       noise_sd=NOISE_SD)
    jax.block_until_ready((rval_b, rfb_b))
    assert bool(jnp.allclose(rval_b, rval_ref, atol=5e-2, rtol=5e-2))
    assert bool(jnp.allclose(rfb_b, rfb_ref, atol=5e-2, rtol=5e-2))

    # --- larger N: exercises multi-tile grid (>= 2 steps, megacore-shardable) ---
    N_BIG = 600
    tokens_big = jax.random.randint(k_tok2, (N_BIG,), 0, N_WORD_EMBEDDINGS)
    rval_g, rfb_g = pos_tagger_forward(params, tokens_big, None,
                                       return_freq_bins=True, train=False,
                                       noise_sd=NOISE_SD,
                                       matmul_dtype=jnp.float32)
    jax.block_until_ready((rval_g, rfb_g))
    rval_gref, rfb_gref = reference_forward(params, tokens_big)
    assert rval_g.shape == (N_BIG, 1, N_OUT)
    assert bool(jnp.allclose(rval_g, rval_gref, atol=1e-5, rtol=1e-5))
    assert bool(jnp.allclose(rfb_g, rfb_gref, atol=1e-5, rtol=1e-5))

    # --- train path: in-kernel Gaussian noise on inputs and both projections ---
    rval_t, rfb_t = pos_tagger_forward(params, tokens_big, k_noise,
                                       return_freq_bins=True, train=True,
                                       noise_sd=NOISE_SD)
    jax.block_until_ready((rval_t, rfb_t))
    assert rval_t.shape == (N_BIG, 1, N_OUT)
    assert rfb_t.shape == (N_BIG, 1, N_FREQ_BINS)
    assert bool(jnp.all(jnp.isfinite(rval_t)))
    assert bool(jnp.all(jnp.isfinite(rfb_t)))

    print("KERNEL_OK")
</pallas_src>

<mosaic_0001>
module attributes {stable_mosaic.version = 11 : i64} {
  func.func @postagger_eval_kernel(%arg0: i32, %arg1: memref<256x32xf32, #tpu.memory_space<vmem>>, %arg2: memref<32x384xf32, #tpu.memory_space<vmem>>, %arg3: memref<1x384xf32, #tpu.memory_space<vmem>>, %arg4: memref<128x128xf32, #tpu.memory_space<vmem>>, %arg5: memref<1x128xf32, #tpu.memory_space<vmem>>, %arg6: memref<256x128xf32, #tpu.memory_space<vmem>>) attributes {dimension_semantics = [#tpu.dimension_semantics<parallel>], iteration_bounds = array<i64: 1>, scalar_prefetch = 0 : i64, scratch_operands = 0 : i64, tpu.core_type = #tpu.core_type<tc>, window_params = [{transform_indices = @transform_0, window_bounds = array<i64: 256, 32>}, {pipeline_mode = #tpu.pipeline_mode<synchronous>, transform_indices = @transform_1, window_bounds = array<i64: 32, 384>}, {pipeline_mode = #tpu.pipeline_mode<synchronous>, transform_indices = @transform_2, window_bounds = array<i64: 1, 384>}, {pipeline_mode = #tpu.pipeline_mode<synchronous>, transform_indices = @transform_3, window_bounds = array<i64: 128, 128>}, {pipeline_mode = #tpu.pipeline_mode<synchronous>, transform_indices = @transform_4, window_bounds = array<i64: 1, 128>}, {transform_indices = @transform_5, window_bounds = array<i64: 256, 128>}]} {
    %c0 = arith.constant 0 : index
    %c0_0 = arith.constant 0 : index
    %0 = vector.load %arg1[%c0, %c0_0] : memref<256x32xf32, #tpu.memory_space<vmem>>, vector<256x32xf32>
    %c0_1 = arith.constant 0 : index
    %c0_2 = arith.constant 0 : index
    %1 = vector.load %arg2[%c0_1, %c0_2] : memref<32x384xf32, #tpu.memory_space<vmem>>, vector<32x384xf32>
    %c0_3 = arith.constant 0 : index
    %c0_4 = arith.constant 0 : index
    %2 = vector.load %arg3[%c0_3, %c0_4] : memref<1x384xf32, #tpu.memory_space<vmem>>, vector<1x384xf32>
    %cst = arith.constant dense<0.000000e+00> : vector<256x384xf32>
    %3 = tpu.matmul %0, %1, %cst {dimension_numbers = #tpu.dot_dimension_numbers<[1], [0], [0], [1], [0, 0, 1, 1], [], []>} : vector<256x32xf32>, vector<32x384xf32>, vector<256x384xf32> -> vector<256x384xf32>
    %4 = vector.broadcast %2 : vector<1x384xf32> to vector<256x384xf32>
    %5 = arith.addf %3, %4 : vector<256x384xf32>
    %6 = vector.extract_strided_slice %5 {offsets = [0, 0], sizes = [256, 128], strides = [1, 1]} : vector<256x384xf32> to vector<256x128xf32>
    %7 = arith.negf %6 : vector<256x128xf32>
    %8 = math.exp %7 : vector<256x128xf32>
    %cst_5 = arith.constant 1.000000e+00 : f32
    %9 = vector.broadcast %cst_5 : f32 to vector<256x128xf32>
    %10 = arith.addf %9, %8 : vector<256x128xf32>
    %11 = arith.divf %9, %10 : vector<256x128xf32>
    %12 = vector.extract_strided_slice %5 {offsets = [0, 128], sizes = [256, 128], strides = [1, 1]} : vector<256x384xf32> to vector<256x128xf32>
    %13 = math.tanh %12 : vector<256x128xf32>
    %14 = vector.extract_strided_slice %5 {offsets = [0, 256], sizes = [256, 128], strides = [1, 1]} : vector<256x384xf32> to vector<256x128xf32>
    %15 = arith.negf %14 : vector<256x128xf32>
    %16 = math.exp %15 : vector<256x128xf32>
    %cst_6 = arith.constant 1.000000e+00 : f32
    %17 = vector.broadcast %cst_6 : f32 to vector<256x128xf32>
    %18 = arith.addf %17, %16 : vector<256x128xf32>
    %19 = arith.divf %17, %18 : vector<256x128xf32>
    %20 = arith.mulf %11, %13 : vector<256x128xf32>
    %21 = math.tanh %20 : vector<256x128xf32>
    %22 = arith.mulf %19, %21 : vector<256x128xf32>
    %23 = math.tanh %22 : vector<256x128xf32>
    %c0_7 = arith.constant 0 : index
    %c0_8 = arith.constant 0 : index
    %24 = vector.load %arg4[%c0_7, %c0_8] : memref<128x128xf32, #tpu.memory_space<vmem>>, vector<128x128xf32>
    %cst_9 = arith.constant dense<0.000000e+00> : vector<256x128xf32>
    %25 = tpu.matmul %23, %24, %cst_9 {dimension_numbers = #tpu.dot_dimension_numbers<[1], [0], [0], [1], [0, 0, 1, 1], [], []>} : vector<256x128xf32>, vector<128x128xf32>, vector<256x128xf32> -> vector<256x128xf32>
    %c0_10 = arith.constant 0 : index
    %c0_11 = arith.constant 0 : index
    %26 = vector.load %arg5[%c0_10, %c0_11] : memref<1x128xf32, #tpu.memory_space<vmem>>, vector<1x128xf32>
    %27 = vector.broadcast %26 : vector<1x128xf32> to vector<256x128xf32>
    %28 = arith.addf %25, %27 : vector<256x128xf32>
    %c0_12 = arith.constant 0 : index
    %c0_13 = arith.constant 0 : index
    %29 = vector.load %arg6[%c0_12, %c0_13] : memref<256x128xf32, #tpu.memory_space<vmem>>, vector<256x128xf32>
    tpu.vector_store %arg6[%c0_12, %c0_13], %28 {strides = array<i32>} : memref<256x128xf32, #tpu.memory_space<vmem>>, vector<256x128xf32>,
    return
  }
  func.func @transform_0(%arg0: i32) -> (i32, i32) {
    %c0_i32 = arith.constant 0 : i32
    %c0_i32_0 = arith.constant 0 : i32
    return %arg0, %c0_i32 : i32, i32
  }
  func.func @transform_1(%arg0: i32) -> (i32, i32) {
    %c0_i32 = arith.constant 0 : i32
    %c0_i32_0 = arith.constant 0 : i32
    %c0_i32_1 = arith.constant 0 : i32
    return %c0_i32, %c0_i32_0 : i32, i32
  }
  func.func @transform_2(%arg0: i32) -> (i32, i32) {
    %c0_i32 = arith.constant 0 : i32
    %c0_i32_0 = arith.constant 0 : i32
    %c0_i32_1 = arith.constant 0 : i32
    return %c0_i32, %c0_i32_0 : i32, i32
  }
  func.func @transform_3(%arg0: i32) -> (i32, i32) {
    %c0_i32 = arith.constant 0 : i32
    %c0_i32_0 = arith.constant 0 : i32
    %c0_i32_1 = arith.constant 0 : i32
    return %c0_i32, %c0_i32_0 : i32, i32
  }
  func.func @transform_4(%arg0: i32) -> (i32, i32) {
    %c0_i32 = arith.constant 0 : i32
    %c0_i32_0 = arith.constant 0 : i32
    %c0_i32_1 = arith.constant 0 : i32
    return %c0_i32, %c0_i32_0 : i32, i32
  }
  func.func @transform_5(%arg0: i32) -> (i32, i32) {
    %c0_i32 = arith.constant 0 : i32
    %c0_i32_0 = arith.constant 0 : i32
    return %arg0, %c0_i32 : i32, i32
  }
}

</mosaic_0001>

<llo_original>
// kernel: tpu_custom_call.1
$region0: #{tpu_custom_call.1}
  #allocation0 [shape = 'u32[]', space=smem, size = 0x4, offset = 0x4, fixed_abs, tag = 'smem constant byte address 0x4 - core index']
  #allocation1 [shape = 'u32[144,128]{1,0:T(1,128)}', space=vmem, size = 0x12000, scoped, tag = 'internal scratch']
  %s0 = inlined_call_operand.vmem [shape: f32[256,32], index: 0, kind: input, shape index: {}]
  %s1 = inlined_call_operand.vmem [shape: f32[32,384], index: 1, kind: input, shape index: {}]
  %s2 = inlined_call_operand.vmem [shape: f32[1,384], index: 2, kind: input, shape index: {}]
  %s3 = inlined_call_operand.vmem [shape: f32[128,128], index: 3, kind: input, shape index: {}]
  %s4 = inlined_call_operand.vmem [shape: f32[1,128], index: 4, kind: input, shape index: {}]
  %s5 = inlined_call_operand.hbm [shape: f32[256,128], index: 5, kind: output, shape index: {}]
  %s6 = sld [smem:[#allocation0]]
  $region30: #{tpu_custom_call.1} parent=0
    _
  %s8 = ssub.s32 1, %s6
  %s9 = scalar_select 0, %s8, %s6
  $region1: #{tpu_custom_call.1} parent=0
    #allocation2 [shape = 'u8[131072]{0}', space=vmem, size = 0x20000, scoped, tag = 'output window, operand 0, single buffered']
    #allocation3 [shape = 's32[1]{0}', space=sflag, size = 0x4, scoped, tag = 'scoped memory for tpu_custom_call.1']
    %10 = vsyncpa [#allocation3], 0
    // Predicated region
    $region2: #{tpu_custom_call.1} parent=1 // pred_check
      _
    $region3: #{tpu_custom_call.1} parent=1 // pred_check_branch
      %12 = sbr.rel (0) target = $region5
    $region4: #{tpu_custom_call.1} parent=1 // pred_region
      _
    $region5: #{tpu_custom_call.1} parent=1 // pred_fallthru
      _
    // Predicated region
    $region6: #{tpu_custom_call.1} parent=1 // pred_check
      _
    $region7: #{tpu_custom_call.1} parent=1 // pred_check_branch
      %14 = sbr.rel (0) target = $region9
    $region8: #{tpu_custom_call.1} parent=1 // pred_region
      _
    $region9: #{tpu_custom_call.1} parent=1 // pred_fallthru
      _
    // Predicated region
    $region10: #{tpu_custom_call.1} parent=1 // pred_check
      _
    $region11: #{tpu_custom_call.1} parent=1 // pred_check_branch
      %16 = sbr.rel (0) target = $region13
    $region12: #{tpu_custom_call.1} parent=1 // pred_region
      _
    $region13: #{tpu_custom_call.1} parent=1 // pred_fallthru
      _
    // Predicated region
    $region14: #{tpu_custom_call.1} parent=1 // pred_check
      _
    $region15: #{tpu_custom_call.1} parent=1 // pred_check_branch
      %18 = sbr.rel (0) target = $region17
    $region16: #{tpu_custom_call.1} parent=1 // pred_region
      _
    $region17: #{tpu_custom_call.1} parent=1 // pred_fallthru
      _
    // Predicated region
    $region18: #{tpu_custom_call.1} parent=1 // pred_check
      _
    $region19: #{tpu_custom_call.1} parent=1 // pred_check_branch
      %20 = sbr.rel (0) target = $region21
    $region20: #{tpu_custom_call.1} parent=1 // pred_region
      _
    $region21: #{tpu_custom_call.1} parent=1 // pred_fallthru
      _
    %v21 = vld [vmem:[%s0] sm:$0xff]
    %v22 = vld [vmem:[%s0 + $0x8] sm:$0xff]
    %v23 = vld [vmem:[%s0 + $0x10] sm:$0xff]
    %v24 = vld [vmem:[%s0 + $0x18] sm:$0xff]
    %v25 = vld [vmem:[%s0 + $0x20] sm:$0xff]
    %v26 = vld [vmem:[%s0 + $0x28] sm:$0xff]
    %v27 = vld [vmem:[%s0 + $0x30] sm:$0xff]
    %v28 = vld [vmem:[%s0 + $0x38] sm:$0xff]
    %v29 = vld [vmem:[%s0 + $0x40] sm:$0xff]
    %v30 = vld [vmem:[%s0 + $0x48] sm:$0xff]
    %v31 = vld [vmem:[%s0 + $0x50] sm:$0xff]
    %v32 = vld [vmem:[%s0 + $0x58] sm:$0xff]
    %v33 = vld [vmem:[%s0 + $0x60] sm:$0xff]
    %v34 = vld [vmem:[%s0 + $0x68] sm:$0xff]
    %v35 = vld [vmem:[%s0 + $0x70] sm:$0xff]
    %v36 = vld [vmem:[%s0 + $0x78] sm:$0xff]
    %v37 = vld [vmem:[%s0 + $0x80] sm:$0xff]
    %v38 = vld [vmem:[%s0 + $0x88] sm:$0xff]
    %v39 = vld [vmem:[%s0 + $0x90] sm:$0xff]
    %v40 = vld [vmem:[%s0 + $0x98] sm:$0xff]
    %v41 = vld [vmem:[%s0 + $0xa0] sm:$0xff]
    %v42 = vld [vmem:[%s0 + $0xa8] sm:$0xff]
    %v43 = vld [vmem:[%s0 + $0xb0] sm:$0xff]
    %v44 = vld [vmem:[%s0 + $0xb8] sm:$0xff]
    %v45 = vld [vmem:[%s0 + $0xc0] sm:$0xff]
    %v46 = vld [vmem:[%s0 + $0xc8] sm:$0xff]
    %v47 = vld [vmem:[%s0 + $0xd0] sm:$0xff]
    %v48 = vld [vmem:[%s0 + $0xd8] sm:$0xff]
    %v49 = vld [vmem:[%s0 + $0xe0] sm:$0xff]
    %v50 = vld [vmem:[%s0 + $0xe8] sm:$0xff]
    %v51 = vld [vmem:[%s0 + $0xf0] sm:$0xff]
    %v52 = vld [vmem:[%s0 + $0xf8] sm:$0xff]
    %v53 = vld [vmem:[%s1] sm:$0xff]
    %v54 = vld [vmem:[%s1 + $0x8] sm:$0xff]
    %v55 = vld [vmem:[%s1 + $0x10] sm:$0xff]
    %v56 = vld [vmem:[%s1 + $0x18] sm:$0xff]
    %v57 = vld [vmem:[%s1 + $0x20] sm:$0xff]
    %v58 = vld [vmem:[%s1 + $0x28] sm:$0xff]
    %v59 = vld [vmem:[%s1 + $0x30] sm:$0xff]
    %v60 = vld [vmem:[%s1 + $0x38] sm:$0xff]
    %v61 = vld [vmem:[%s1 + $0x40] sm:$0xff]
    %v62 = vld [vmem:[%s1 + $0x48] sm:$0xff]
    %v63 = vld [vmem:[%s1 + $0x50] sm:$0xff]
    %v64 = vld [vmem:[%s1 + $0x58] sm:$0xff]
    %v65 = vld [vmem:[%s2] sm:$0x7]
    %v67 = vlaneseq
    %v68 = vshrl.u32 %v67, 7
    %v69 = vsub.s32 0, %v68
    %v70 = vrot.slane %v65, %v69
    %v71 = vlaneseq
    %v72 = vshrl.u32 %v71, 7
    %v73 = vsub.s32 1, %v72
    %v74 = vrot.slane %v65, %v73
    %v75 = vlaneseq
    %v76 = vshrl.u32 %v75, 7
    %v77 = vsub.s32 2, %v76
    %v78 = vrot.slane %v65, %v77
    %vm82 = vcmask 261120
    %v84 = vsel %vm82, %v21, 0
    %v87 = vsel %vm82, %v22, 0
    %v90 = vsel %vm82, %v23, 0
    %v93 = vsel %vm82, %v24, 0
    %v96 = vsel %vm82, %v25, 0
    %v99 = vsel %vm82, %v26, 0
    %v102 = vsel %vm82, %v27, 0
    %v105 = vsel %vm82, %v28, 0
    %v108 = vsel %vm82, %v29, 0
    %v111 = vsel %vm82, %v30, 0
    %v114 = vsel %vm82, %v31, 0
    %v117 = vsel %vm82, %v32, 0
    %v120 = vsel %vm82, %v33, 0
    %v123 = vsel %vm82, %v34, 0
    %v126 = vsel %vm82, %v35, 0
    %v129 = vsel %vm82, %v36, 0
    %v132 = vsel %vm82, %v37, 0
    %v135 = vsel %vm82, %v38, 0
    %v138 = vsel %vm82, %v39, 0
    %v141 = vsel %vm82, %v40, 0
    %v144 = vsel %vm82, %v41, 0
    %v147 = vsel %vm82, %v42, 0
    %v150 = vsel %vm82, %v43, 0
    %v153 = vsel %vm82, %v44, 0
    %v156 = vsel %vm82, %v45, 0
    %v159 = vsel %vm82, %v46, 0
    %v162 = vsel %vm82, %v47, 0
    %v165 = vsel %vm82, %v48, 0
    %v168 = vsel %vm82, %v49, 0
    %v171 = vsel %vm82, %v50, 0
    %v174 = vsel %vm82, %v51, 0
    %v177 = vsel %vm82, %v52, 0
    %179 = vmatprep.subr.mxu0 %v54
    %180 = vmatpush1.msra.mxu0 %v53
    %181 = vmatprep.subr.mxu0 %v57
    %182 = vmatpush1.msra.mxu0 %v56
    %183 = vmatprep.subr.mxu0 %v60
    %184 = vmatpush1.msra.mxu0 %v59
    %185 = vmatprep.subr.mxu0 %v63
    %186 = vmatpush1.msra.mxu0 %v62
    %187 = vmatprep.subr.mxu0 0.0
    %188 = vmatpush1.msra.mxu0 0.0
    %189 = vmatprep.subr.mxu0 0.0
    %190 = vmatpush1.msra.mxu0 0.0
    %191 = vmatprep.subr.mxu0 0.0
    %192 = vmatpush1.msra.mxu0 0.0
    %193 = vmatprep.subr.mxu0 0.0
    %194 = vmatpush1.msra.mxu0 0.0
    %195 = vmatprep.subr.mxu0 0.0
    %196 = vmatpush1.msra.mxu0 0.0
    %197 = vmatprep.subr.mxu0 0.0
    %198 = vmatpush1.msra.mxu0 0.0
    %199 = vmatprep.subr.mxu0 0.0
    %200 = vmatpush1.msra.mxu0 0.0
    %201 = vmatprep.subr.mxu0 0.0
    %202 = vmatpush1.msra.mxu0 0.0
    %203 = vmatprep.subr.mxu0 0.0
    %204 = vmatpush1.msra.mxu0 0.0
    %205 = vmatprep.subr.mxu0 0.0
    %206 = vmatpush1.msra.mxu0 0.0
    %207 = vmatprep.subr.mxu0 0.0
    %208 = vmatpush1.msra.mxu0 0.0
    %209 = vmatprep.subr.mxu0 0.0
    %210 = vmatpush1.msra.mxu0 0.0
    %211 = vmatprep.subr.mxu0 0.0
    %212 = vmatpush1.msra.mxu0 0.0
    %213 = vmatprep.subr.mxu0 0.0
    %214 = vmatpush1.msra.mxu0 0.0
    %215 = vmatprep.subr.mxu0 0.0
    %216 = vmatpush1.msra.mxu0 0.0
    %217 = vmatprep.subr.mxu0 0.0
    %218 = vmatpush1.msra.mxu0 0.0
    %219 = vmatprep.subr.mxu0 0.0
    %220 = vmatpush1.msra.mxu0 0.0
    %221 = vmatprep.subr.mxu0 0.0
    %222 = vmatpush1.msra.mxu0 0.0
    %223 = vmatprep.subr.mxu0 0.0
    %224 = vmatpush1.msra.mxu0 0.0
    %225 = vmatprep.subr.mxu0 0.0
    %226 = vmatpush1.msra.mxu0 0.0
    %227 = vmatprep.subr.mxu0 0.0
    %228 = vmatpush1.msra.mxu0 0.0
    %229 = vmatprep.subr.mxu0 0.0
    %230 = vmatpush1.msra.mxu0 0.0
    %231 = vmatprep.subr.mxu0 0.0
    %232 = vmatpush1.msra.mxu0 0.0
    %233 = vmatprep.subr.mxu0 0.0
    %234 = vmatpush1.msra.mxu0 0.0
    %235 = vmatprep.subr.mxu0 0.0
    %236 = vmatpush1.msra.mxu0 0.0
    %237 = vmatprep.subr.mxu0 0.0
    %238 = vmatpush1.msra.mxu0 0.0
    %239 = vmatprep.subr.mxu0 0.0
    %240 = vmatpush1.msra.mxu0 0.0
    %241 = vmatprep.subr.mxu0 0.0
    %242 = vmatpush1.msra.mxu0 0.0
    %243 = vmatprep.mubr.f32.mxu0 0.0
    %244 = vmatmul.mubr.f32.gmra.mrb[0].mxu0 %v84
    %v245 = vpop.f32.mrb[0].mxu0
    %v246 = vadd.f32 %v70, %v245
    %v247 = vpop.f32.mrb[0].mxu0
    %v248 = vadd.f32 %v74, %v247
    %249 = vmatprep.mubr.f32.mxu0 0.0
    %250 = vmatmul.mubr.f32.gmra.mrb[0].mxu0 %v87
    %v251 = vpop.f32.mrb[0].mxu0
    %v252 = vadd.f32 %v70, %v251
    %v253 = vpop.f32.mrb[0].mxu0
    %v254 = vadd.f32 %v74, %v253
    %255 = vmatprep.mubr.f32.mxu0 0.0
    %256 = vmatmul.mubr.f32.gmra.mrb[0].mxu0 %v90
    %v257 = vpop.f32.mrb[0].mxu0
    %v258 = vadd.f32 %v70, %v257
    %v259 = vpop.f32.mrb[0].mxu0
    %v260 = vadd.f32 %v74, %v259
    %261 = vmatprep.mubr.f32.mxu0 0.0
    %262 = vmatmul.mubr.f32.gmra.mrb[0].mxu0 %v93
    %v263 = vpop.f32.mrb[0].mxu0
    %v264 = vadd.f32 %v70, %v263
    %v265 = vpop.f32.mrb[0].mxu0
    %v266 = vadd.f32 %v74, %v265
    %267 = vmatprep.mubr.f32.mxu0 0.0
    %268 = vmatmul.mubr.f32.gmra.mrb[0].mxu0 %v96
    %v269 = vpop.f32.mrb[0].mxu0
    %v270 = vadd.f32 %v70, %v269
    %v271 = vpop.f32.mrb[0].mxu0
    %v272 = vadd.f32 %v74, %v271
    %273 = vmatprep.mubr.f32.mxu0 0.0
    %274 = vmatmul.mubr.f32.gmra.mrb[0].mxu0 %v99
    %v275 = vpop.f32.mrb[0].mxu0
    %v276 = vadd.f32 %v70, %v275
    %v277 = vpop.f32.mrb[0].mxu0
    %v278 = vadd.f32 %v74, %v277
    %279 = vmatprep.mubr.f32.mxu0 0.0
    %280 = vmatmul.mubr.f32.gmra.mrb[0].mxu0 %v102
    %v281 = vpop.f32.mrb[0].mxu0
    %v282 = vadd.f32 %v70, %v281
    %v283 = vpop.f32.mrb[0].mxu0
    %v284 = vadd.f32 %v74, %v283
    %285 = vmatprep.mubr.f32.mxu0 0.0
    %286 = vmatmul.mubr.f32.gmra.mrb[0].mxu0 %v105
    %v287 = vpop.f32.mrb[0].mxu0
    %v288 = vadd.f32 %v70, %v287
    %v289 = vpop.f32.mrb[0].mxu0
    %v290 = vadd.f32 %v74, %v289
    %291 = vmatprep.mubr.f32.mxu0 0.0
    %292 = vmatmul.mubr.f32.gmra.mrb[0].mxu0 %v108
    %v293 = vpop.f32.mrb[0].mxu0
    %v294 = vadd.f32 %v70, %v293
    %v295 = vpop.f32.mrb[0].mxu0
    %v296 = vadd.f32 %v74, %v295
    %297 = vmatprep.mubr.f32.mxu0 0.0
    %298 = vmatmul.mubr.f32.gmra.mrb[0].mxu0 %v111
    %v299 = vpop.f32.mrb[0].mxu0
    %v300 = vadd.f32 %v70, %v299
    %v301 = vpop.f32.mrb[0].mxu0
    %v302 = vadd.f32 %v74, %v301
    %303 = vmatprep.mubr.f32.mxu0 0.0
    %304 = vmatmul.mubr.f32.gmra.mrb[0].mxu0 %v114
    %v305 = vpop.f32.mrb[0].mxu0
    %v306 = vadd.f32 %v70, %v305
    %v307 = vpop.f32.mrb[0].mxu0
    %v308 = vadd.f32 %v74, %v307
    %309 = vmatprep.mubr.f32.mxu0 0.0
    %310 = vmatmul.mubr.f32.gmra.mrb[0].mxu0 %v117
    %v311 = vpop.f32.mrb[0].mxu0
    %v312 = vadd.f32 %v70, %v311
    %v313 = vpop.f32.mrb[0].mxu0
    %v314 = vadd.f32 %v74, %v313
    %315 = vmatprep.mubr.f32.mxu0 0.0
    %316 = vmatmul.mubr.f32.gmra.mrb[0].mxu0 %v120
    %v317 = vpop.f32.mrb[0].mxu0
    %v318 = vadd.f32 %v70, %v317
    %v319 = vpop.f32.mrb[0].mxu0
    %v320 = vadd.f32 %v74, %v319
    %321 = vmatprep.mubr.f32.mxu0 0.0
    %322 = vmatmul.mubr.f32.gmra.mrb[0].mxu0 %v123
    %v323 = vpop.f32.mrb[0].mxu0
    %v324 = vadd.f32 %v70, %v323
    %v325 = vpop.f32.mrb[0].mxu0
    %v326 = vadd.f32 %v74, %v325
    %327 = vmatprep.mubr.f32.mxu0 0.0
    %328 = vmatmul.mubr.f32.gmra.mrb[0].mxu0 %v126
    %v329 = vpop.f32.mrb[0].mxu0
    %v330 = vadd.f32 %v70, %v329
    %v331 = vpop.f32.mrb[0].mxu0
    %v332 = vadd.f32 %v74, %v331
    %333 = vmatprep.mubr.f32.mxu0 0.0
    %334 = vmatmul.mubr.f32.gmra.mrb[0].mxu0 %v129
    %v335 = vpop.f32.mrb[0].mxu0
    %v336 = vadd.f32 %v70, %v335
    %v337 = vpop.f32.mrb[0].mxu0
    %v338 = vadd.f32 %v74, %v337
    %339 = vmatprep.mubr.f32.mxu0 0.0
    %340 = vmatmul.mubr.f32.gmra.mrb[0].mxu0 %v132
    %v341 = vpop.f32.mrb[0].mxu0
    %v342 = vadd.f32 %v70, %v341
    %v343 = vpop.f32.mrb[0].mxu0
    %v344 = vadd.f32 %v74, %v343
    %345 = vmatprep.mubr.f32.mxu0 0.0
    %346 = vmatmul.mubr.f32.gmra.mrb[0].mxu0 %v135
    %v347 = vpop.f32.mrb[0].mxu0
    %v348 = vadd.f32 %v70, %v347
    %v349 = vpop.f32.mrb[0].mxu0
    %v350 = vadd.f32 %v74, %v349
    %351 = vmatprep.mubr.f32.mxu0 0.0
    %352 = vmatmul.mubr.f32.gmra.mrb[0].mxu0 %v138
    %v353 = vpop.f32.mrb[0].mxu0
    %v354 = vadd.f32 %v70, %v353
    %v355 = vpop.f32.mrb[0].mxu0
    %v356 = vadd.f32 %v74, %v355
    %357 = vmatprep.mubr.f32.mxu0 0.0
    %358 = vmatmul.mubr.f32.gmra.mrb[0].mxu0 %v141
    %v359 = vpop.f32.mrb[0].mxu0
    %v360 = vadd.f32 %v70, %v359
    %v361 = vpop.f32.mrb[0].mxu0
    %v362 = vadd.f32 %v74, %v361
    %363 = vmatprep.mubr.f32.mxu0 0.0
    %364 = vmatmul.mubr.f32.gmra.mrb[0].mxu0 %v144
    %v365 = vpop.f32.mrb[0].mxu0
    %v366 = vadd.f32 %v70, %v365
    %v367 = vpop.f32.mrb[0].mxu0
    %v368 = vadd.f32 %v74, %v367
    %369 = vmatprep.mubr.f32.mxu0 0.0
    %370 = vmatmul.mubr.f32.gmra.mrb[0].mxu0 %v147
    %v371 = vpop.f32.mrb[0].mxu0
    %v372 = vadd.f32 %v70, %v371
    %v373 = vpop.f32.mrb[0].mxu0
    %v374 = vadd.f32 %v74, %v373
    %375 = vmatprep.mubr.f32.mxu0 0.0
    %376 = vmatmul.mubr.f32.gmra.mrb[0].mxu0 %v150
    %v377 = vpop.f32.mrb[0].mxu0
    %v378 = vadd.f32 %v70, %v377
    %v379 = vpop.f32.mrb[0].mxu0
    %v380 = vadd.f32 %v74, %v379
    %381 = vmatprep.mubr.f32.mxu0 0.0
    %382 = vmatmul.mubr.f32.gmra.mrb[0].mxu0 %v153
    %v383 = vpop.f32.mrb[0].mxu0
    %v384 = vadd.f32 %v70, %v383
    %v385 = vpop.f32.mrb[0].mxu0
    %v386 = vadd.f32 %v74, %v385
    %387 = vmatprep.mubr.f32.mxu0 0.0
    %388 = vmatmul.mubr.f32.gmra.mrb[0].mxu0 %v156
    %v389 = vpop.f32.mrb[0].mxu0
    %v390 = vadd.f32 %v70, %v389
    %v391 = vpop.f32.mrb[0].mxu0
    %v392 = vadd.f32 %v74, %v391
    %393 = vmatprep.mubr.f32.mxu0 0.0
    %394 = vmatmul.mubr.f32.gmra.mrb[0].mxu0 %v159
    %v395 = vpop.f32.mrb[0].mxu0
    %v396 = vadd.f32 %v70, %v395
    %v397 = vpop.f32.mrb[0].mxu0
    %v398 = vadd.f32 %v74, %v397
    %399 = vmatprep.mubr.f32.mxu0 0.0
    %400 = vmatmul.mubr.f32.gmra.mrb[0].mxu0 %v162
    %v401 = vpop.f32.mrb[0].mxu0
    %v402 = vadd.f32 %v70, %v401
    %v403 = vpop.f32.mrb[0].mxu0
    %v404 = vadd.f32 %v74, %v403
    %405 = vmatprep.mubr.f32.mxu0 0.0
    %406 = vmatmul.mubr.f32.gmra.mrb[0].mxu0 %v165
    %v407 = vpop.f32.mrb[0].mxu0
    %v408 = vadd.f32 %v70, %v407
    %v409 = vpop.f32.mrb[0].mxu0
    %v410 = vadd.f32 %v74, %v409
    %411 = vmatprep.mubr.f32.mxu0 0.0
    %412 = vmatmul.mubr.f32.gmra.mrb[0].mxu0 %v168
    %v413 = vpop.f32.mrb[0].mxu0
    %v414 = vadd.f32 %v70, %v413
    %v415 = vpop.f32.mrb[0].mxu0
    %v416 = vadd.f32 %v74, %v415
    %417 = vmatprep.mubr.f32.mxu0 0.0
    %418 = vmatmul.mubr.f32.gmra.mrb[0].mxu0 %v171
    %v419 = vpop.f32.mrb[0].mxu0
    %v420 = vadd.f32 %v70, %v419
    %v421 = vpop.f32.mrb[0].mxu0
    %v422 = vadd.f32 %v74, %v421
    %423 = vmatprep.mubr.f32.mxu0 0.0
    %424 = vmatmul.mubr.f32.gmra.mrb[0].mxu0 %v174
    %v425 = vpop.f32.mrb[0].mxu0
    %v426 = vadd.f32 %v70, %v425
    %v427 = vpop.f32.mrb[0].mxu0
    %v428 = vadd.f32 %v74, %v427
    %429 = vmatprep.mubr.f32.mxu0 0.0
    %430 = vmatmul.mubr.f32.gmra.mrb[0].mxu0 %v177
    %v431 = vpop.f32.mrb[0].mxu0
    %v432 = vadd.f32 %v70, %v431
    %v433 = vpop.f32.mrb[0].mxu0
    %v434 = vadd.f32 %v74, %v433
    %435 = vdwg.mxu0
    %436 = vmatprep.subr.mxu0 0.0
    %437 = vmatpush1.msra.mxu0 %v55
    %438 = vmatprep.subr.mxu0 0.0
    %439 = vmatpush1.msra.mxu0 %v58
    %440 = vmatprep.subr.mxu0 0.0
    %441 = vmatpush1.msra.mxu0 %v61
    %442 = vmatprep.subr.mxu0 0.0
    %443 = vmatpush1.msra.mxu0 %v64
    %444 = vmatprep.subr.mxu0 0.0
    %445 = vmatpush1.msra.mxu0 0.0
    %446 = vmatprep.subr.mxu0 0.0
    %447 = vmatpush1.msra.mxu0 0.0
    %448 = vmatprep.subr.mxu0 0.0
    %449 = vmatpush1.msra.mxu0 0.0
    %450 = vmatprep.subr.mxu0 0.0
    %451 = vmatpush1.msra.mxu0 0.0
    %452 = vmatprep.subr.mxu0 0.0
    %453 = vmatpush1.msra.mxu0 0.0
    %454 = vmatprep.subr.mxu0 0.0
    %455 = vmatpush1.msra.mxu0 0.0
    %456 = vmatprep.subr.mxu0 0.0
    %457 = vmatpush1.msra.mxu0 0.0
    %458 = vmatprep.subr.mxu0 0.0
    %459 = vmatpush1.msra.mxu0 0.0
    %460 = vmatprep.subr.mxu0 0.0
    %461 = vmatpush1.msra.mxu0 0.0
    %462 = vmatprep.subr.mxu0 0.0
    %463 = vmatpush1.msra.mxu0 0.0
    %464 = vmatprep.subr.mxu0 0.0
    %465 = vmatpush1.msra.mxu0 0.0
    %466 = vmatprep.subr.mxu0 0.0
    %467 = vmatpush1.msra.mxu0 0.0
    %468 = vmatprep.subr.mxu0 0.0
    %469 = vmatpush1.msra.mxu0 0.0
    %470 = vmatprep.subr.mxu0 0.0
    %471 = vmatpush1.msra.mxu0 0.0
    %472 = vmatprep.subr.mxu0 0.0
    %473 = vmatpush1.msra.mxu0 0.0
    %474 = vmatprep.subr.mxu0 0.0
    %475 = vmatpush1.msra.mxu0 0.0
    %476 = vmatprep.subr.mxu0 0.0
    %477 = vmatpush1.msra.mxu0 0.0
    %478 = vmatprep.subr.mxu0 0.0
    %479 = vmatpush1.msra.mxu0 0.0
    %480 = vmatprep.subr.mxu0 0.0
    %481 = vmatpush1.msra.mxu0 0.0
    %482 = vmatprep.subr.mxu0 0.0
    %483 = vmatpush1.msra.mxu0 0.0
    %484 = vmatprep.subr.mxu0 0.0
    %485 = vmatpush1.msra.mxu0 0.0
    %486 = vmatprep.subr.mxu0 0.0
    %487 = vmatpush1.msra.mxu0 0.0
    %488 = vmatprep.subr.mxu0 0.0
    %489 = vmatpush1.msra.mxu0 0.0
    %490 = vmatprep.subr.mxu0 0.0
    %491 = vmatpush1.msra.mxu0 0.0
    %492 = vmatprep.subr.mxu0 0.0
    %493 = vmatpush1.msra.mxu0 0.0
    %494 = vmatprep.subr.mxu0 0.0
    %495 = vmatpush1.msra.mxu0 0.0
    %496 = vmatprep.subr.mxu0 0.0
    %497 = vmatpush1.msra.mxu0 0.0
    %498 = vmatprep.subr.mxu0 0.0
    %499 = vmatpush1.msra.mxu0 0.0
    %500 = vmatprep.mubr.f32.mxu0 0.0
    %501 = vmatmul.mubr.f32.gmra.mrb[0].mxu0 %v84
    %v502 = vpop.f32.mrb[0].mxu0
    %v503 = vadd.f32 %v78, %v502
    %v504 = vpop.f32.mrb[0].mxu0
    %505 = vmatprep.mubr.f32.mxu0 0.0
    %506 = vmatmul.mubr.f32.gmra.mrb[0].mxu0 %v87
    %v507 = vpop.f32.mrb[0].mxu0
    %v508 = vadd.f32 %v78, %v507
    %v509 = vpop.f32.mrb[0].mxu0
    %510 = vmatprep.mubr.f32.mxu0 0.0
    %511 = vmatmul.mubr.f32.gmra.mrb[0].mxu0 %v90
    %v512 = vpop.f32.mrb[0].mxu0
    %v513 = vadd.f32 %v78, %v512
    %v514 = vpop.f32.mrb[0].mxu0
    %515 = vmatprep.mubr.f32.mxu0 0.0
    %516 = vmatmul.mubr.f32.gmra.mrb[0].mxu0 %v93
    %v517 = vpop.f32.mrb[0].mxu0
    %v518 = vadd.f32 %v78, %v517
    %v519 = vpop.f32.mrb[0].mxu0
    %520 = vmatprep.mubr.f32.mxu0 0.0
    %521 = vmatmul.mubr.f32.gmra.mrb[0].mxu0 %v96
    %v522 = vpop.f32.mrb[0].mxu0
    %v523 = vadd.f32 %v78, %v522
    %v524 = vpop.f32.mrb[0].mxu0
    %525 = vmatprep.mubr.f32.mxu0 0.0
    %526 = vmatmul.mubr.f32.gmra.mrb[0].mxu0 %v99
    %v527 = vpop.f32.mrb[0].mxu0
    %v528 = vadd.f32 %v78, %v527
    %v529 = vpop.f32.mrb[0].mxu0
    %530 = vmatprep.mubr.f32.mxu0 0.0
    %531 = vmatmul.mubr.f32.gmra.mrb[0].mxu0 %v102
    %v532 = vpop.f32.mrb[0].mxu0
    %v533 = vadd.f32 %v78, %v532
    %v534 = vpop.f32.mrb[0].mxu0
    %535 = vmatprep.mubr.f32.mxu0 0.0
    %536 = vmatmul.mubr.f32.gmra.mrb[0].mxu0 %v105
    %v537 = vpop.f32.mrb[0].mxu0
    %v538 = vadd.f32 %v78, %v537
    %v539 = vpop.f32.mrb[0].mxu0
    %540 = vmatprep.mubr.f32.mxu0 0.0
    %541 = vmatmul.mubr.f32.gmra.mrb[0].mxu0 %v108
    %v542 = vpop.f32.mrb[0].mxu0
    %v543 = vadd.f32 %v78, %v542
    %v544 = vpop.f32.mrb[0].mxu0
    %545 = vmatprep.mubr.f32.mxu0 0.0
    %546 = vmatmul.mubr.f32.gmra.mrb[0].mxu0 %v111
    %v547 = vpop.f32.mrb[0].mxu0
    %v548 = vadd.f32 %v78, %v547
    %v549 = vpop.f32.mrb[0].mxu0
    %550 = vmatprep.mubr.f32.mxu0 0.0
    %551 = vmatmul.mubr.f32.gmra.mrb[0].mxu0 %v114
    %v552 = vpop.f32.mrb[0].mxu0
    %v553 = vadd.f32 %v78, %v552
    %v554 = vpop.f32.mrb[0].mxu0
    %555 = vmatprep.mubr.f32.mxu0 0.0
    %556 = vmatmul.mubr.f32.gmra.mrb[0].mxu0 %v117
    %v557 = vpop.f32.mrb[0].mxu0
    %v558 = vadd.f32 %v78, %v557
    %v559 = vpop.f32.mrb[0].mxu0
    %560 = vmatprep.mubr.f32.mxu0 0.0
    %561 = vmatmul.mubr.f32.gmra.mrb[0].mxu0 %v120
    %v562 = vpop.f32.mrb[0].mxu0
    %v563 = vadd.f32 %v78, %v562
    %v564 = vpop.f32.mrb[0].mxu0
    %565 = vmatprep.mubr.f32.mxu0 0.0
    %566 = vmatmul.mubr.f32.gmra.mrb[0].mxu0 %v123
    %v567 = vpop.f32.mrb[0].mxu0
    %v568 = vadd.f32 %v78, %v567
    %v569 = vpop.f32.mrb[0].mxu0
    %570 = vmatprep.mubr.f32.mxu0 0.0
    %571 = vmatmul.mubr.f32.gmra.mrb[0].mxu0 %v126
    %v572 = vpop.f32.mrb[0].mxu0
    %v573 = vadd.f32 %v78, %v572
    %v574 = vpop.f32.mrb[0].mxu0
    %575 = vmatprep.mubr.f32.mxu0 0.0
    %576 = vmatmul.mubr.f32.gmra.mrb[0].mxu0 %v129
    %v577 = vpop.f32.mrb[0].mxu0
    %v578 = vadd.f32 %v78, %v577
    %v579 = vpop.f32.mrb[0].mxu0
    %580 = vmatprep.mubr.f32.mxu0 0.0
    %581 = vmatmul.mubr.f32.gmra.mrb[0].mxu0 %v132
    %v582 = vpop.f32.mrb[0].mxu0
    %v583 = vadd.f32 %v78, %v582
    %v584 = vpop.f32.mrb[0].mxu0
    %585 = vmatprep.mubr.f32.mxu0 0.0
    %586 = vmatmul.mubr.f32.gmra.mrb[0].mxu0 %v135
    %v587 = vpop.f32.mrb[0].mxu0
    %v588 = vadd.f32 %v78, %v587
    %v589 = vpop.f32.mrb[0].mxu0
    %590 = vmatprep.mubr.f32.mxu0 0.0
    %591 = vmatmul.mubr.f32.gmra.mrb[0].mxu0 %v138
    %v592 = vpop.f32.mrb[0].mxu0
    %v593 = vadd.f32 %v78, %v592
    %v594 = vpop.f32.mrb[0].mxu0
    %595 = vmatprep.mubr.f32.mxu0 0.0
    %596 = vmatmul.mubr.f32.gmra.mrb[0].mxu0 %v141
    %v597 = vpop.f32.mrb[0].mxu0
    %v598 = vadd.f32 %v78, %v597
    %v599 = vpop.f32.mrb[0].mxu0
    %600 = vmatprep.mubr.f32.mxu0 0.0
    %601 = vmatmul.mubr.f32.gmra.mrb[0].mxu0 %v144
    %v602 = vpop.f32.mrb[0].mxu0
    %v603 = vadd.f32 %v78, %v602
    %v604 = vpop.f32.mrb[0].mxu0
    %605 = vmatprep.mubr.f32.mxu0 0.0
    %606 = vmatmul.mubr.f32.gmra.mrb[0].mxu0 %v147
    %v607 = vpop.f32.mrb[0].mxu0
    %v608 = vadd.f32 %v78, %v607
    %v609 = vpop.f32.mrb[0].mxu0
    %610 = vmatprep.mubr.f32.mxu0 0.0
    %611 = vmatmul.mubr.f32.gmra.mrb[0].mxu0 %v150
    %v612 = vpop.f32.mrb[0].mxu0
    %v613 = vadd.f32 %v78, %v612
    %v614 = vpop.f32.mrb[0].mxu0
    %615 = vmatprep.mubr.f32.mxu0 0.0
    %616 = vmatmul.mubr.f32.gmra.mrb[0].mxu0 %v153
    %v617 = vpop.f32.mrb[0].mxu0
    %v618 = vadd.f32 %v78, %v617
    %v619 = vpop.f32.mrb[0].mxu0
    %620 = vmatprep.mubr.f32.mxu0 0.0
    %621 = vmatmul.mubr.f32.gmra.mrb[0].mxu0 %v156
    %v622 = vpop.f32.mrb[0].mxu0
    %v623 = vadd.f32 %v78, %v622
    %v624 = vpop.f32.mrb[0].mxu0
    %625 = vmatprep.mubr.f32.mxu0 0.0
    %626 = vmatmul.mubr.f32.gmra.mrb[0].mxu0 %v159
    %v627 = vpop.f32.mrb[0].mxu0
    %v628 = vadd.f32 %v78, %v627
    %v629 = vpop.f32.mrb[0].mxu0
    %630 = vmatprep.mubr.f32.mxu0 0.0
    %631 = vmatmul.mubr.f32.gmra.mrb[0].mxu0 %v162
    %v632 = vpop.f32.mrb[0].mxu0
    %v633 = vadd.f32 %v78, %v632
    %v634 = vpop.f32.mrb[0].mxu0
    %635 = vmatprep.mubr.f32.mxu0 0.0
    %636 = vmatmul.mubr.f32.gmra.mrb[0].mxu0 %v165
    %v637 = vpop.f32.mrb[0].mxu0
    %v638 = vadd.f32 %v78, %v637
    %v639 = vpop.f32.mrb[0].mxu0
    %640 = vmatprep.mubr.f32.mxu0 0.0
    %641 = vmatmul.mubr.f32.gmra.mrb[0].mxu0 %v168
    %v642 = vpop.f32.mrb[0].mxu0
    %v643 = vadd.f32 %v78, %v642
    %v644 = vpop.f32.mrb[0].mxu0
    %645 = vmatprep.mubr.f32.mxu0 0.0
    %646 = vmatmul.mubr.f32.gmra.mrb[0].mxu0 %v171
    %v647 = vpop.f32.mrb[0].mxu0
    %v648 = vadd.f32 %v78, %v647
    %v649 = vpop.f32.mrb[0].mxu0
    %650 = vmatprep.mubr.f32.mxu0 0.0
    %651 = vmatmul.mubr.f32.gmra.mrb[0].mxu0 %v174
    %v652 = vpop.f32.mrb[0].mxu0
    %v653 = vadd.f32 %v78, %v652
    %v654 = vpop.f32.mrb[0].mxu0
    %655 = vmatprep.mubr.f32.mxu0 0.0
    %656 = vmatmul.mubr.f32.gmra.mrb[0].mxu0 %v177
    %v657 = vpop.f32.mrb[0].mxu0
    %v658 = vadd.f32 %v78, %v657
    %v659 = vpop.f32.mrb[0].mxu0
    %660 = vdwg.mxu0
    %v661 = vxor.u32 %v246, 2147483648
    %v662 = vxor.u32 %v252, 2147483648
    %v663 = vxor.u32 %v258, 2147483648
    %v664 = vxor.u32 %v264, 2147483648
    %v665 = vxor.u32 %v270, 2147483648
    %v666 = vxor.u32 %v276, 2147483648
    %v667 = vxor.u32 %v282, 2147483648
    %v668 = vxor.u32 %v288, 2147483648
    %v669 = vxor.u32 %v294, 2147483648
    %v670 = vxor.u32 %v300, 2147483648
    %v671 = vxor.u32 %v306, 2147483648
    %v672 = vxor.u32 %v312, 2147483648
    %v673 = vxor.u32 %v318, 2147483648
    %v674 = vxor.u32 %v324, 2147483648
    %v675 = vxor.u32 %v330, 2147483648
    %v676 = vxor.u32 %v336, 2147483648
    %v677 = vxor.u32 %v342, 2147483648
    %v678 = vxor.u32 %v348, 2147483648
    %v679 = vxor.u32 %v354, 2147483648
    %v680 = vxor.u32 %v360, 2147483648
    %v681 = vxor.u32 %v366, 2147483648
    %v682 = vxor.u32 %v372, 2147483648
    %v683 = vxor.u32 %v378, 2147483648
    %v684 = vxor.u32 %v384, 2147483648
    %v685 = vxor.u32 %v390, 2147483648
    %v686 = vxor.u32 %v396, 2147483648
    %v687 = vxor.u32 %v402, 2147483648
    %v688 = vxor.u32 %v408, 2147483648
    %v689 = vxor.u32 %v414, 2147483648
    %v690 = vxor.u32 %v420, 2147483648
    %v691 = vxor.u32 %v426, 2147483648
    %v692 = vxor.u32 %v432, 2147483648
    %v693 = vmul.f32 %v661, 1.442695
    %v694 = vpow.pop %v693
    %v695 = vmul.f32 %v662, 1.442695
    %v696 = vpow.pop %v695
    %v697 = vmul.f32 %v663, 1.442695
    %v698 = vpow.pop %v697
    %v699 = vmul.f32 %v664, 1.442695
    %v700 = vpow.pop %v699
    %v701 = vmul.f32 %v665, 1.442695
    %v702 = vpow.pop %v701
    %v703 = vmul.f32 %v666, 1.442695
    %v704 = vpow.pop %v703
    %v705 = vmul.f32 %v667, 1.442695
    %v706 = vpow.pop %v705
    %v707 = vmul.f32 %v668, 1.442695
    %v708 = vpow.pop %v707
    %v709 = vmul.f32 %v669, 1.442695
    %v710 = vpow.pop %v709
    %v711 = vmul.f32 %v670, 1.442695
    %v712 = vpow.pop %v711
    %v713 = vmul.f32 %v671, 1.442695
    %v714 = vpow.pop %v713
    %v715 = vmul.f32 %v672, 1.442695
    %v716 = vpow.pop %v715
    %v717 = vmul.f32 %v673, 1.442695
    %v718 = vpow.pop %v717
    %v719 = vmul.f32 %v674, 1.442695
    %v720 = vpow.pop %v719
    %v721 = vmul.f32 %v675, 1.442695
    %v722 = vpow.pop %v721
    %v723 = vmul.f32 %v676, 1.442695
    %v724 = vpow.pop %v723
    %v725 = vmul.f32 %v677, 1.442695
    %v726 = vpow.pop %v725
    %v727 = vmul.f32 %v678, 1.442695
    %v728 = vpow.pop %v727
    %v729 = vmul.f32 %v679, 1.442695
    %v730 = vpow.pop %v729
    %v731 = vmul.f32 %v680, 1.442695
    %v732 = vpow.pop %v731
    %v733 = vmul.f32 %v681, 1.442695
    %v734 = vpow.pop %v733
    %v735 = vmul.f32 %v682, 1.442695
    %v736 = vpow.pop %v735
    %v737 = vmul.f32 %v683, 1.442695
    %v738 = vpow.pop %v737
    %v739 = vmul.f32 %v684, 1.442695
    %v740 = vpow.pop %v739
    %v741 = vmul.f32 %v685, 1.442695
    %v742 = vpow.pop %v741
    %v743 = vmul.f32 %v686, 1.442695
    %v744 = vpow.pop %v743
    %v745 = vmul.f32 %v687, 1.442695
    %v746 = vpow.pop %v745
    %v747 = vmul.f32 %v688, 1.442695
    %v748 = vpow.pop %v747
    %v749 = vmul.f32 %v689, 1.442695
    %v750 = vpow.pop %v749
    %v751 = vmul.f32 %v690, 1.442695
    %v752 = vpow.pop %v751
    %v753 = vmul.f32 %v691, 1.442695
    %v754 = vpow.pop %v753
    %v755 = vmul.f32 %v692, 1.442695
    %v756 = vpow.pop %v755
    %v757 = vadd.f32 %v694, 1.0
    %v758 = vadd.f32 %v696, 1.0
    %v759 = vadd.f32 %v698, 1.0
    %v760 = vadd.f32 %v700, 1.0
    %v761 = vadd.f32 %v702, 1.0
    %v762 = vadd.f32 %v704, 1.0
    %v763 = vadd.f32 %v706, 1.0
    %v764 = vadd.f32 %v708, 1.0
    %v765 = vadd.f32 %v710, 1.0
    %v766 = vadd.f32 %v712, 1.0
    %v767 = vadd.f32 %v714, 1.0
    %v768 = vadd.f32 %v716, 1.0
    %v769 = vadd.f32 %v718, 1.0
    %v770 = vadd.f32 %v720, 1.0
    %v771 = vadd.f32 %v722, 1.0
    %v772 = vadd.f32 %v724, 1.0
    %v773 = vadd.f32 %v726, 1.0
    %v774 = vadd.f32 %v728, 1.0
    %v775 = vadd.f32 %v730, 1.0
    %v776 = vadd.f32 %v732, 1.0
    %v777 = vadd.f32 %v734, 1.0
    %v778 = vadd.f32 %v736, 1.0
    %v779 = vadd.f32 %v738, 1.0
    %v780 = vadd.f32 %v740, 1.0
    %v781 = vadd.f32 %v742, 1.0
    %v782 = vadd.f32 %v744, 1.0
    %v783 = vadd.f32 %v746, 1.0
    %v784 = vadd.f32 %v748, 1.0
    %v785 = vadd.f32 %v750, 1.0
    %v786 = vadd.f32 %v752, 1.0
    %v787 = vadd.f32 %v754, 1.0
    %v788 = vadd.f32 %v756, 1.0
    %v789 = vrcp.pop %v757
    %v790 = vmul.f32 1.0, %v789
    %v791 = vrcp.pop %v758
    %v792 = vmul.f32 1.0, %v791
    %v793 = vrcp.pop %v759
    %v794 = vmul.f32 1.0, %v793
    %v795 = vrcp.pop %v760
    %v796 = vmul.f32 1.0, %v795
    %v797 = vrcp.pop %v761
    %v798 = vmul.f32 1.0, %v797
    %v799 = vrcp.pop %v762
    %v800 = vmul.f32 1.0, %v799
    %v801 = vrcp.pop %v763
    %v802 = vmul.f32 1.0, %v801
    %v803 = vrcp.pop %v764
    %v804 = vmul.f32 1.0, %v803
    %v805 = vrcp.pop %v765
    %v806 = vmul.f32 1.0, %v805
    %v807 = vrcp.pop %v766
    %v808 = vmul.f32 1.0, %v807
    %v809 = vrcp.pop %v767
    %v810 = vmul.f32 1.0, %v809
    %v811 = vrcp.pop %v768
    %v812 = vmul.f32 1.0, %v811
    %v813 = vrcp.pop %v769
    %v814 = vmul.f32 1.0, %v813
    %v815 = vrcp.pop %v770
    %v816 = vmul.f32 1.0, %v815
    %v817 = vrcp.pop %v771
    %v818 = vmul.f32 1.0, %v817
    %v819 = vrcp.pop %v772
    %v820 = vmul.f32 1.0, %v819
    %v821 = vrcp.pop %v773
    %v822 = vmul.f32 1.0, %v821
    %v823 = vrcp.pop %v774
    %v824 = vmul.f32 1.0, %v823
    %v825 = vrcp.pop %v775
    %v826 = vmul.f32 1.0, %v825
    %v827 = vrcp.pop %v776
    %v828 = vmul.f32 1.0, %v827
    %v829 = vrcp.pop %v777
    %v830 = vmul.f32 1.0, %v829
    %v831 = vrcp.pop %v778
    %v832 = vmul.f32 1.0, %v831
    %v833 = vrcp.pop %v779
    %v834 = vmul.f32 1.0, %v833
    %v835 = vrcp.pop %v780
    %v836 = vmul.f32 1.0, %v835
    %v837 = vrcp.pop %v781
    %v838 = vmul.f32 1.0, %v837
    %v839 = vrcp.pop %v782
    %v840 = vmul.f32 1.0, %v839
    %v841 = vrcp.pop %v783
    %v842 = vmul.f32 1.0, %v841
    %v843 = vrcp.pop %v784
    %v844 = vmul.f32 1.0, %v843
    %v845 = vrcp.pop %v785
    %v846 = vmul.f32 1.0, %v845
    %v847 = vrcp.pop %v786
    %v848 = vmul.f32 1.0, %v847
    %v849 = vrcp.pop %v787
    %v850 = vmul.f32 1.0, %v849
    %v851 = vrcp.pop %v788
    %v852 = vmul.f32 1.0, %v851
    %v853 = vtanh.pop %v248
    %v854 = vtanh.pop %v254
    %v855 = vtanh.pop %v260
    %v856 = vtanh.pop %v266
    %v857 = vtanh.pop %v272
    %v858 = vtanh.pop %v278
    %v859 = vtanh.pop %v284
    %v860 = vtanh.pop %v290
    %v861 = vtanh.pop %v296
    %v862 = vtanh.pop %v302
    %v863 = vtanh.pop %v308
    %v864 = vtanh.pop %v314
    %v865 = vtanh.pop %v320
    %v866 = vtanh.pop %v326
    %v867 = vtanh.pop %v332
    %v868 = vtanh.pop %v338
    %v869 = vtanh.pop %v344
    %v870 = vtanh.pop %v350
    %v871 = vtanh.pop %v356
    %v872 = vtanh.pop %v362
    %v873 = vtanh.pop %v368
    %v874 = vtanh.pop %v374
    %v875 = vtanh.pop %v380
    %v876 = vtanh.pop %v386
    %v877 = vtanh.pop %v392
    %v878 = vtanh.pop %v398
    %v879 = vtanh.pop %v404
    %v880 = vtanh.pop %v410
    %v881 = vtanh.pop %v416
    %v882 = vtanh.pop %v422
    %v883 = vtanh.pop %v428
    %v884 = vtanh.pop %v434
    %v885 = vxor.u32 %v503, 2147483648
    %v886 = vxor.u32 %v508, 2147483648
    %v887 = vxor.u32 %v513, 2147483648
    %v888 = vxor.u32 %v518, 2147483648
    %v889 = vxor.u32 %v523, 2147483648
    %v890 = vxor.u32 %v528, 2147483648
    %v891 = vxor.u32 %v533, 2147483648
    %v892 = vxor.u32 %v538, 2147483648
    %v893 = vxor.u32 %v543, 2147483648
    %v894 = vxor.u32 %v548, 2147483648
    %v895 = vxor.u32 %v553, 2147483648
    %v896 = vxor.u32 %v558, 2147483648
    %v897 = vxor.u32 %v563, 2147483648
    %v898 = vxor.u32 %v568, 2147483648
    %v899 = vxor.u32 %v573, 2147483648
    %v900 = vxor.u32 %v578, 2147483648
    %v901 = vxor.u32 %v583, 2147483648
    %v902 = vxor.u32 %v588, 2147483648
    %v903 = vxor.u32 %v593, 2147483648
    %v904 = vxor.u32 %v598, 2147483648
    %v905 = vxor.u32 %v603, 2147483648
    %v906 = vxor.u32 %v608, 2147483648
    %v907 = vxor.u32 %v613, 2147483648
    %v908 = vxor.u32 %v618, 2147483648
    %v909 = vxor.u32 %v623, 2147483648
    %v910 = vxor.u32 %v628, 2147483648
    %v911 = vxor.u32 %v633, 2147483648
    %v912 = vxor.u32 %v638, 2147483648
    %v913 = vxor.u32 %v643, 2147483648
    %v914 = vxor.u32 %v648, 2147483648
    %v915 = vxor.u32 %v653, 2147483648
    %v916 = vxor.u32 %v658, 2147483648
    %v917 = vmul.f32 %v885, 1.442695
    %v918 = vpow.pop %v917
    %v919 = vmul.f32 %v886, 1.442695
    %v920 = vpow.pop %v919
    %v921 = vmul.f32 %v887, 1.442695
    %v922 = vpow.pop %v921
    %v923 = vmul.f32 %v888, 1.442695
    %v924 = vpow.pop %v923
    %v925 = vmul.f32 %v889, 1.442695
    %v926 = vpow.pop %v925
    %v927 = vmul.f32 %v890, 1.442695
    %v928 = vpow.pop %v927
    %v929 = vmul.f32 %v891, 1.442695
    %v930 = vpow.pop %v929
    %v931 = vmul.f32 %v892, 1.442695
    %v932 = vpow.pop %v931
    %v933 = vmul.f32 %v893, 1.442695
    %v934 = vpow.pop %v933
    %v935 = vmul.f32 %v894, 1.442695
    %v936 = vpow.pop %v935
    %v937 = vmul.f32 %v895, 1.442695
    %v938 = vpow.pop %v937
    %v939 = vmul.f32 %v896, 1.442695
    %v940 = vpow.pop %v939
    %v941 = vmul.f32 %v897, 1.442695
    %v942 = vpow.pop %v941
    %v943 = vmul.f32 %v898, 1.442695
    %v944 = vpow.pop %v943
    %v945 = vmul.f32 %v899, 1.442695
    %v946 = vpow.pop %v945
    %v947 = vmul.f32 %v900, 1.442695
    %v948 = vpow.pop %v947
    %v949 = vmul.f32 %v901, 1.442695
    %v950 = vpow.pop %v949
    %v951 = vmul.f32 %v902, 1.442695
    %v952 = vpow.pop %v951
    %v953 = vmul.f32 %v903, 1.442695
    %v954 = vpow.pop %v953
    %v955 = vmul.f32 %v904, 1.442695
    %v956 = vpow.pop %v955
    %v957 = vmul.f32 %v905, 1.442695
    %v958 = vpow.pop %v957
    %v959 = vmul.f32 %v906, 1.442695
    %v960 = vpow.pop %v959
    %v961 = vmul.f32 %v907, 1.442695
    %v962 = vpow.pop %v961
    %v963 = vmul.f32 %v908, 1.442695
    %v964 = vpow.pop %v963
    %v965 = vmul.f32 %v909, 1.442695
    %v966 = vpow.pop %v965
    %v967 = vmul.f32 %v910, 1.442695
    %v968 = vpow.pop %v967
    %v969 = vmul.f32 %v911, 1.442695
    %v970 = vpow.pop %v969
    %v971 = vmul.f32 %v912, 1.442695
    %v972 = vpow.pop %v971
    %v973 = vmul.f32 %v913, 1.442695
    %v974 = vpow.pop %v973
    %v975 = vmul.f32 %v914, 1.442695
    %v976 = vpow.pop %v975
    %v977 = vmul.f32 %v915, 1.442695
    %v978 = vpow.pop %v977
    %v979 = vmul.f32 %v916, 1.442695
    %v980 = vpow.pop %v979
    %v981 = vadd.f32 %v918, 1.0
    %v982 = vadd.f32 %v920, 1.0
    %v983 = vadd.f32 %v922, 1.0
    %v984 = vadd.f32 %v924, 1.0
    %v985 = vadd.f32 %v926, 1.0
    %v986 = vadd.f32 %v928, 1.0
    %v987 = vadd.f32 %v930, 1.0
    %v988 = vadd.f32 %v932, 1.0
    %v989 = vadd.f32 %v934, 1.0
    %v990 = vadd.f32 %v936, 1.0
    %v991 = vadd.f32 %v938, 1.0
    %v992 = vadd.f32 %v940, 1.0
    %v993 = vadd.f32 %v942, 1.0
    %v994 = vadd.f32 %v944, 1.0
    %v995 = vadd.f32 %v946, 1.0
    %v996 = vadd.f32 %v948, 1.0
    %v997 = vadd.f32 %v950, 1.0
    %v998 = vadd.f32 %v952, 1.0
    %v999 = vadd.f32 %v954, 1.0
    %v1000 = vadd.f32 %v956, 1.0
    %v1001 = vadd.f32 %v958, 1.0
    %v1002 = vadd.f32 %v960, 1.0
    %v1003 = vadd.f32 %v962, 1.0
    %v1004 = vadd.f32 %v964, 1.0
    %v1005 = vadd.f32 %v966, 1.0
    %v1006 = vadd.f32 %v968, 1.0
    %v1007 = vadd.f32 %v970, 1.0
    %v1008 = vadd.f32 %v972, 1.0
    %v1009 = vadd.f32 %v974, 1.0
    %v1010 = vadd.f32 %v976, 1.0
    %v1011 = vadd.f32 %v978, 1.0
    %v1012 = vadd.f32 %v980, 1.0
    %v1013 = vrcp.pop %v981
    %v1014 = vmul.f32 1.0, %v1013
    %v1015 = vrcp.pop %v982
    %v1016 = vmul.f32 1.0, %v1015
    %v1017 = vrcp.pop %v983
    %v1018 = vmul.f32 1.0, %v1017
    %v1019 = vrcp.pop %v984
    %v1020 = vmul.f32 1.0, %v1019
    %v1021 = vrcp.pop %v985
    %v1022 = vmul.f32 1.0, %v1021
    %v1023 = vrcp.pop %v986
    %v1024 = vmul.f32 1.0, %v1023
    %v1025 = vrcp.pop %v987
    %v1026 = vmul.f32 1.0, %v1025
    %v1027 = vrcp.pop %v988
    %v1028 = vmul.f32 1.0, %v1027
    %v1029 = vrcp.pop %v989
    %v1030 = vmul.f32 1.0, %v1029
    %v1031 = vrcp.pop %v990
    %v1032 = vmul.f32 1.0, %v1031
    %v1033 = vrcp.pop %v991
    %v1034 = vmul.f32 1.0, %v1033
    %v1035 = vrcp.pop %v992
    %v1036 = vmul.f32 1.0, %v1035
    %v1037 = vrcp.pop %v993
    %v1038 = vmul.f32 1.0, %v1037
    %v1039 = vrcp.pop %v994
    %v1040 = vmul.f32 1.0, %v1039
    %v1041 = vrcp.pop %v995
    %v1042 = vmul.f32 1.0, %v1041
    %v1043 = vrcp.pop %v996
    %v1044 = vmul.f32 1.0, %v1043
    %v1045 = vrcp.pop %v997
    %v1046 = vmul.f32 1.0, %v1045
    %v1047 = vrcp.pop %v998
    %v1048 = vmul.f32 1.0, %v1047
    %v1049 = vrcp.pop %v999
    %v1050 = vmul.f32 1.0, %v1049
    %v1051 = vrcp.pop %v1000
    %v1052 = vmul.f32 1.0, %v1051
    %v1053 = vrcp.pop %v1001
    %v1054 = vmul.f32 1.0, %v1053
    %v1055 = vrcp.pop %v1002
    %v1056 = vmul.f32 1.0, %v1055
    %v1057 = vrcp.pop %v1003
    %v1058 = vmul.f32 1.0, %v1057
    %v1059 = vrcp.pop %v1004
    %v1060 = vmul.f32 1.0, %v1059
    %v1061 = vrcp.pop %v1005
    %v1062 = vmul.f32 1.0, %v1061
    %v1063 = vrcp.pop %v1006
    %v1064 = vmul.f32 1.0, %v1063
    %v1065 = vrcp.pop %v1007
    %v1066 = vmul.f32 1.0, %v1065
    %v1067 = vrcp.pop %v1008
    %v1068 = vmul.f32 1.0, %v1067
    %v1069 = vrcp.pop %v1009
    %v1070 = vmul.f32 1.0, %v1069
    %v1071 = vrcp.pop %v1010
    %v1072 = vmul.f32 1.0, %v1071
    %v1073 = vrcp.pop %v1011
    %v1074 = vmul.f32 1.0, %v1073
    %v1075 = vrcp.pop %v1012
    %v1076 = vmul.f32 1.0, %v1075
    %v1077 = vmul.f32 %v790, %v853
    %v1078 = vmul.f32 %v792, %v854
    %v1079 = vmul.f32 %v794, %v855
    %v1080 = vmul.f32 %v796, %v856
    %v1081 = vmul.f32 %v798, %v857
    %v1082 = vmul.f32 %v800, %v858
    %v1083 = vmul.f32 %v802, %v859
    %v1084 = vmul.f32 %v804, %v860
    %v1085 = vmul.f32 %v806, %v861
    %v1086 = vmul.f32 %v808, %v862
    %v1087 = vmul.f32 %v810, %v863
    %v1088 = vmul.f32 %v812, %v864
    %v1089 = vmul.f32 %v814, %v865
    %v1090 = vmul.f32 %v816, %v866
    %v1091 = vmul.f32 %v818, %v867
    %v1092 = vmul.f32 %v820, %v868
    %v1093 = vmul.f32 %v822, %v869
    %v1094 = vmul.f32 %v824, %v870
    %v1095 = vmul.f32 %v826, %v871
    %v1096 = vmul.f32 %v828, %v872
    %v1097 = vmul.f32 %v830, %v873
    %v1098 = vmul.f32 %v832, %v874
    %v1099 = vmul.f32 %v834, %v875
    %v1100 = vmul.f32 %v836, %v876
    %v1101 = vmul.f32 %v838, %v877
    %v1102 = vmul.f32 %v840, %v878
    %v1103 = vmul.f32 %v842, %v879
    %v1104 = vmul.f32 %v844, %v880
    %v1105 = vmul.f32 %v846, %v881
    %v1106 = vmul.f32 %v848, %v882
    %v1107 = vmul.f32 %v850, %v883
    %v1108 = vmul.f32 %v852, %v884
    %v1109 = vtanh.pop %v1077
    %v1110 = vtanh.pop %v1078
    %v1111 = vtanh.pop %v1079
    %v1112 = vtanh.pop %v1080
    %v1113 = vtanh.pop %v1081
    %v1114 = vtanh.pop %v1082
    %v1115 = vtanh.pop %v1083
    %v1116 = vtanh.pop %v1084
    %v1117 = vtanh.pop %v1085
    %v1118 = vtanh.pop %v1086
    %v1119 = vtanh.pop %v1087
    %v1120 = vtanh.pop %v1088
    %v1121 = vtanh.pop %v1089
    %v1122 = vtanh.pop %v1090
    %v1123 = vtanh.pop %v1091
    %v1124 = vtanh.pop %v1092
    %v1125 = vtanh.pop %v1093
    %v1126 = vtanh.pop %v1094
    %v1127 = vtanh.pop %v1095
    %v1128 = vtanh.pop %v1096
    %v1129 = vtanh.pop %v1097
    %v1130 = vtanh.pop %v1098
    %v1131 = vtanh.pop %v1099
    %v1132 = vtanh.pop %v1100
    %v1133 = vtanh.pop %v1101
    %v1134 = vtanh.pop %v1102
    %v1135 = vtanh.pop %v1103
    %v1136 = vtanh.pop %v1104
    %v1137 = vtanh.pop %v1105
    %v1138 = vtanh.pop %v1106
    %v1139 = vtanh.pop %v1107
    %v1140 = vtanh.pop %v1108
    %v1141 = vmul.f32 %v1014, %v1109
    %v1142 = vmul.f32 %v1016, %v1110
    %v1143 = vmul.f32 %v1018, %v1111
    %v1144 = vmul.f32 %v1020, %v1112
    %v1145 = vmul.f32 %v1022, %v1113
    %v1146 = vmul.f32 %v1024, %v1114
    %v1147 = vmul.f32 %v1026, %v1115
    %v1148 = vmul.f32 %v1028, %v1116
    %v1149 = vmul.f32 %v1030, %v1117
    %v1150 = vmul.f32 %v1032, %v1118
    %v1151 = vmul.f32 %v1034, %v1119
    %v1152 = vmul.f32 %v1036, %v1120
    %v1153 = vmul.f32 %v1038, %v1121
    %v1154 = vmul.f32 %v1040, %v1122
    %v1155 = vmul.f32 %v1042, %v1123
    %v1156 = vmul.f32 %v1044, %v1124
    %v1157 = vmul.f32 %v1046, %v1125
    %v1158 = vmul.f32 %v1048, %v1126
    %v1159 = vmul.f32 %v1050, %v1127
    %v1160 = vmul.f32 %v1052, %v1128
    %v1161 = vmul.f32 %v1054, %v1129
    %v1162 = vmul.f32 %v1056, %v1130
    %v1163 = vmul.f32 %v1058, %v1131
    %v1164 = vmul.f32 %v1060, %v1132
    %v1165 = vmul.f32 %v1062, %v1133
    %v1166 = vmul.f32 %v1064, %v1134
    %v1167 = vmul.f32 %v1066, %v1135
    %v1168 = vmul.f32 %v1068, %v1136
    %v1169 = vmul.f32 %v1070, %v1137
    %v1170 = vmul.f32 %v1072, %v1138
    %v1171 = vmul.f32 %v1074, %v1139
    %v1172 = vmul.f32 %v1076, %v1140
    %v1173 = vtanh.pop %v1141
    %v1174 = vtanh.pop %v1142
    %v1175 = vtanh.pop %v1143
    %v1176 = vtanh.pop %v1144
    %v1177 = vtanh.pop %v1145
    %v1178 = vtanh.pop %v1146
    %v1179 = vtanh.pop %v1147
    %v1180 = vtanh.pop %v1148
    %v1181 = vtanh.pop %v1149
    %v1182 = vtanh.pop %v1150
    %v1183 = vtanh.pop %v1151
    %v1184 = vtanh.pop %v1152
    %v1185 = vtanh.pop %v1153
    %v1186 = vtanh.pop %v1154
    %v1187 = vtanh.pop %v1155
    %v1188 = vtanh.pop %v1156
    %v1189 = vtanh.pop %v1157
    %v1190 = vtanh.pop %v1158
    %v1191 = vtanh.pop %v1159
    %v1192 = vtanh.pop %v1160
    %v1193 = vtanh.pop %v1161
    %v1194 = vtanh.pop %v1162
    %v1195 = vtanh.pop %v1163
    %v1196 = vtanh.pop %v1164
    %v1197 = vtanh.pop %v1165
    %v1198 = vtanh.pop %v1166
    %v1199 = vtanh.pop %v1167
    %v1200 = vtanh.pop %v1168
    %v1201 = vtanh.pop %v1169
    %v1202 = vtanh.pop %v1170
    %v1203 = vtanh.pop %v1171
    %v1204 = vtanh.pop %v1172
    %v1205 = vld [vmem:[%s3] sm:$0xff]
    %v1206 = vld [vmem:[%s3 + $0x8] sm:$0xff]
    %v1207 = vld [vmem:[%s3 + $0x10] sm:$0xff]
    %v1208 = vld [vmem:[%s3 + $0x18] sm:$0xff]
    %v1209 = vld [vmem:[%s3 + $0x20] sm:$0xff]
    %v1210 = vld [vmem:[%s3 + $0x28] sm:$0xff]
    %v1211 = vld [vmem:[%s3 + $0x30] sm:$0xff]
    %v1212 = vld [vmem:[%s3 + $0x38] sm:$0xff]
    %v1213 = vld [vmem:[%s3 + $0x40] sm:$0xff]
    %v1214 = vld [vmem:[%s3 + $0x48] sm:$0xff]
    %v1215 = vld [vmem:[%s3 + $0x50] sm:$0xff]
    %v1216 = vld [vmem:[%s3 + $0x58] sm:$0xff]
    %v1217 = vld [vmem:[%s3 + $0x60] sm:$0xff]
    %v1218 = vld [vmem:[%s3 + $0x68] sm:$0xff]
    %v1219 = vld [vmem:[%s3 + $0x70] sm:$0xff]
    %v1220 = vld [vmem:[%s3 + $0x78] sm:$0xff]
    %v1221 = vld [vmem:[%s4] sm:$0x1]
    %v1223 = vlaneseq
    %v1224 = vshrl.u32 %v1223, 7
    %v1225 = vsub.s32 0, %v1224
    %v1226 = vrot.slane %v1221, %v1225
    %1228 = vmatprep.subr.mxu0 0.0
    %1229 = vmatpush1.msra.mxu0 %v1205
    %1230 = vmatprep.subr.mxu0 0.0
    %1231 = vmatpush1.msra.mxu0 %v1206
    %1232 = vmatprep.subr.mxu0 0.0
    %1233 = vmatpush1.msra.mxu0 %v1207
    %1234 = vmatprep.subr.mxu0 0.0
    %1235 = vmatpush1.msra.mxu0 %v1208
    %1236 = vmatprep.subr.mxu0 0.0
    %1237 = vmatpush1.msra.mxu0 %v1209
    %1238 = vmatprep.subr.mxu0 0.0
    %1239 = vmatpush1.msra.mxu0 %v1210
    %1240 = vmatprep.subr.mxu0 0.0
    %1241 = vmatpush1.msra.mxu0 %v1211
    %1242 = vmatprep.subr.mxu0 0.0
    %1243 = vmatpush1.msra.mxu0 %v1212
    %1244 = vmatprep.subr.mxu0 0.0
    %1245 = vmatpush1.msra.mxu0 %v1213
    %1246 = vmatprep.subr.mxu0 0.0
    %1247 = vmatpush1.msra.mxu0 %v1214
    %1248 = vmatprep.subr.mxu0 0.0
    %1249 = vmatpush1.msra.mxu0 %v1215
    %1250 = vmatprep.subr.mxu0 0.0
    %1251 = vmatpush1.msra.mxu0 %v1216
    %1252 = vmatprep.subr.mxu0 0.0
    %1253 = vmatpush1.msra.mxu0 %v1217
    %1254 = vmatprep.subr.mxu0 0.0
    %1255 = vmatpush1.msra.mxu0 %v1218
    %1256 = vmatprep.subr.mxu0 0.0
    %1257 = vmatpush1.msra.mxu0 %v1219
    %1258 = vmatprep.subr.mxu0 0.0
    %1259 = vmatpush1.msra.mxu0 %v1220
    %1260 = vmatprep.subr.mxu0 0.0
    %1261 = vmatpush1.msra.mxu0 0.0
    %1262 = vmatprep.subr.mxu0 0.0
    %1263 = vmatpush1.msra.mxu0 0.0
    %1264 = vmatprep.subr.mxu0 0.0
    %1265 = vmatpush1.msra.mxu0 0.0
    %1266 = vmatprep.subr.mxu0 0.0
    %1267 = vmatpush1.msra.mxu0 0.0
    %1268 = vmatprep.subr.mxu0 0.0
    %1269 = vmatpush1.msra.mxu0 0.0
    %1270 = vmatprep.subr.mxu0 0.0
    %1271 = vmatpush1.msra.mxu0 0.0
    %1272 = vmatprep.subr.mxu0 0.0
    %1273 = vmatpush1.msra.mxu0 0.0
    %1274 = vmatprep.subr.mxu0 0.0
    %1275 = vmatpush1.msra.mxu0 0.0
    %1276 = vmatprep.subr.mxu0 0.0
    %1277 = vmatpush1.msra.mxu0 0.0
    %1278 = vmatprep.subr.mxu0 0.0
    %1279 = vmatpush1.msra.mxu0 0.0
    %1280 = vmatprep.subr.mxu0 0.0
    %1281 = vmatpush1.msra.mxu0 0.0
    %1282 = vmatprep.subr.mxu0 0.0
    %1283 = vmatpush1.msra.mxu0 0.0
    %1284 = vmatprep.subr.mxu0 0.0
    %1285 = vmatpush1.msra.mxu0 0.0
    %1286 = vmatprep.subr.mxu0 0.0
    %1287 = vmatpush1.msra.mxu0 0.0
    %1288 = vmatprep.subr.mxu0 0.0
    %1289 = vmatpush1.msra.mxu0 0.0
    %1290 = vmatprep.subr.mxu0 0.0
    %1291 = vmatpush1.msra.mxu0 0.0
    %1292 = vmatprep.mubr.f32.mxu0 0.0
    %1293 = vmatmul.mubr.f32.gmra.mrb[0].mxu0 %v1173
    %v1294 = vpop.f32.mrb[0].mxu0
    %v1295 = vadd.f32 %v1226, %v1294
    %v1296 = vpop.f32.mrb[0].mxu0
    %1297 = vmatprep.mubr.f32.mxu0 0.0
    %1298 = vmatmul.mubr.f32.gmra.mrb[0].mxu0 %v1174
    %v1299 = vpop.f32.mrb[0].mxu0
    %v1300 = vadd.f32 %v1226, %v1299
    %v1301 = vpop.f32.mrb[0].mxu0
    %1302 = vmatprep.mubr.f32.mxu0 0.0
    %1303 = vmatmul.mubr.f32.gmra.mrb[0].mxu0 %v1175
    %v1304 = vpop.f32.mrb[0].mxu0
    %v1305 = vadd.f32 %v1226, %v1304
    %v1306 = vpop.f32.mrb[0].mxu0
    %1307 = vmatprep.mubr.f32.mxu0 0.0
    %1308 = vmatmul.mubr.f32.gmra.mrb[0].mxu0 %v1176
    %v1309 = vpop.f32.mrb[0].mxu0
    %v1310 = vadd.f32 %v1226, %v1309
    %v1311 = vpop.f32.mrb[0].mxu0
    %1312 = vmatprep.mubr.f32.mxu0 0.0
    %1313 = vmatmul.mubr.f32.gmra.mrb[0].mxu0 %v1177
    %v1314 = vpop.f32.mrb[0].mxu0
    %v1315 = vadd.f32 %v1226, %v1314
    %v1316 = vpop.f32.mrb[0].mxu0
    %1317 = vmatprep.mubr.f32.mxu0 0.0
    %1318 = vmatmul.mubr.f32.gmra.mrb[0].mxu0 %v1178
    %v1319 = vpop.f32.mrb[0].mxu0
    %v1320 = vadd.f32 %v1226, %v1319
    %v1321 = vpop.f32.mrb[0].mxu0
    %1322 = vmatprep.mubr.f32.mxu0 0.0
    %1323 = vmatmul.mubr.f32.gmra.mrb[0].mxu0 %v1179
    %v1324 = vpop.f32.mrb[0].mxu0
    %v1325 = vadd.f32 %v1226, %v1324
    %v1326 = vpop.f32.mrb[0].mxu0
    %1327 = vmatprep.mubr.f32.mxu0 0.0
    %1328 = vmatmul.mubr.f32.gmra.mrb[0].mxu0 %v1180
    %v1329 = vpop.f32.mrb[0].mxu0
    %v1330 = vadd.f32 %v1226, %v1329
    %v1331 = vpop.f32.mrb[0].mxu0
    %1332 = vmatprep.mubr.f32.mxu0 0.0
    %1333 = vmatmul.mubr.f32.gmra.mrb[0].mxu0 %v1181
    %v1334 = vpop.f32.mrb[0].mxu0
    %v1335 = vadd.f32 %v1226, %v1334
    %v1336 = vpop.f32.mrb[0].mxu0
    %1337 = vmatprep.mubr.f32.mxu0 0.0
    %1338 = vmatmul.mubr.f32.gmra.mrb[0].mxu0 %v1182
    %v1339 = vpop.f32.mrb[0].mxu0
    %v1340 = vadd.f32 %v1226, %v1339
    %v1341 = vpop.f32.mrb[0].mxu0
    %1342 = vmatprep.mubr.f32.mxu0 0.0
    %1343 = vmatmul.mubr.f32.gmra.mrb[0].mxu0 %v1183
    %v1344 = vpop.f32.mrb[0].mxu0
    %v1345 = vadd.f32 %v1226, %v1344
    %v1346 = vpop.f32.mrb[0].mxu0
    %1347 = vmatprep.mubr.f32.mxu0 0.0
    %1348 = vmatmul.mubr.f32.gmra.mrb[0].mxu0 %v1184
    %v1349 = vpop.f32.mrb[0].mxu0
    %v1350 = vadd.f32 %v1226, %v1349
    %v1351 = vpop.f32.mrb[0].mxu0
    %1352 = vmatprep.mubr.f32.mxu0 0.0
    %1353 = vmatmul.mubr.f32.gmra.mrb[0].mxu0 %v1185
    %v1354 = vpop.f32.mrb[0].mxu0
    %v1355 = vadd.f32 %v1226, %v1354
    %v1356 = vpop.f32.mrb[0].mxu0
    %1357 = vmatprep.mubr.f32.mxu0 0.0
    %1358 = vmatmul.mubr.f32.gmra.mrb[0].mxu0 %v1186
    %v1359 = vpop.f32.mrb[0].mxu0
    %v1360 = vadd.f32 %v1226, %v1359
    %v1361 = vpop.f32.mrb[0].mxu0
    %1362 = vmatprep.mubr.f32.mxu0 0.0
    %1363 = vmatmul.mubr.f32.gmra.mrb[0].mxu0 %v1187
    %v1364 = vpop.f32.mrb[0].mxu0
    %v1365 = vadd.f32 %v1226, %v1364
    %v1366 = vpop.f32.mrb[0].mxu0
    %1367 = vmatprep.mubr.f32.mxu0 0.0
    %1368 = vmatmul.mubr.f32.gmra.mrb[0].mxu0 %v1188
    %v1369 = vpop.f32.mrb[0].mxu0
    %v1370 = vadd.f32 %v1226, %v1369
    %v1371 = vpop.f32.mrb[0].mxu0
    %1372 = vmatprep.mubr.f32.mxu0 0.0
    %1373 = vmatmul.mubr.f32.gmra.mrb[0].mxu0 %v1189
    %v1374 = vpop.f32.mrb[0].mxu0
    %v1375 = vadd.f32 %v1226, %v1374
    %v1376 = vpop.f32.mrb[0].mxu0
    %1377 = vmatprep.mubr.f32.mxu0 0.0
    %1378 = vmatmul.mubr.f32.gmra.mrb[0].mxu0 %v1190
    %v1379 = vpop.f32.mrb[0].mxu0
    %v1380 = vadd.f32 %v1226, %v1379
    %v1381 = vpop.f32.mrb[0].mxu0
    %1382 = vmatprep.mubr.f32.mxu0 0.0
    %1383 = vmatmul.mubr.f32.gmra.mrb[0].mxu0 %v1191
    %v1384 = vpop.f32.mrb[0].mxu0
    %v1385 = vadd.f32 %v1226, %v1384
    %v1386 = vpop.f32.mrb[0].mxu0
    %1387 = vmatprep.mubr.f32.mxu0 0.0
    %1388 = vmatmul.mubr.f32.gmra.mrb[0].mxu0 %v1192
    %v1389 = vpop.f32.mrb[0].mxu0
    %v1390 = vadd.f32 %v1226, %v1389
    %v1391 = vpop.f32.mrb[0].mxu0
    %1392 = vmatprep.mubr.f32.mxu0 0.0
    %1393 = vmatmul.mubr.f32.gmra.mrb[0].mxu0 %v1193
    %v1394 = vpop.f32.mrb[0].mxu0
    %v1395 = vadd.f32 %v1226, %v1394
    %v1396 = vpop.f32.mrb[0].mxu0
    %1397 = vmatprep.mubr.f32.mxu0 0.0
    %1398 = vmatmul.mubr.f32.gmra.mrb[0].mxu0 %v1194
    %v1399 = vpop.f32.mrb[0].mxu0
    %v1400 = vadd.f32 %v1226, %v1399
    %v1401 = vpop.f32.mrb[0].mxu0
    %1402 = vmatprep.mubr.f32.mxu0 0.0
    %1403 = vmatmul.mubr.f32.gmra.mrb[0].mxu0 %v1195
    %v1404 = vpop.f32.mrb[0].mxu0
    %v1405 = vadd.f32 %v1226, %v1404
    %v1406 = vpop.f32.mrb[0].mxu0
    %1407 = vmatprep.mubr.f32.mxu0 0.0
    %1408 = vmatmul.mubr.f32.gmra.mrb[0].mxu0 %v1196
    %v1409 = vpop.f32.mrb[0].mxu0
    %v1410 = vadd.f32 %v1226, %v1409
    %v1411 = vpop.f32.mrb[0].mxu0
    %1412 = vmatprep.mubr.f32.mxu0 0.0
    %1413 = vmatmul.mubr.f32.gmra.mrb[0].mxu0 %v1197
    %v1414 = vpop.f32.mrb[0].mxu0
    %v1415 = vadd.f32 %v1226, %v1414
    %v1416 = vpop.f32.mrb[0].mxu0
    %1417 = vmatprep.mubr.f32.mxu0 0.0
    %1418 = vmatmul.mubr.f32.gmra.mrb[0].mxu0 %v1198
    %v1419 = vpop.f32.mrb[0].mxu0
    %v1420 = vadd.f32 %v1226, %v1419
    %v1421 = vpop.f32.mrb[0].mxu0
    %1422 = vmatprep.mubr.f32.mxu0 0.0
    %1423 = vmatmul.mubr.f32.gmra.mrb[0].mxu0 %v1199
    %v1424 = vpop.f32.mrb[0].mxu0
    %v1425 = vadd.f32 %v1226, %v1424
    %v1426 = vpop.f32.mrb[0].mxu0
    %1427 = vmatprep.mubr.f32.mxu0 0.0
    %1428 = vmatmul.mubr.f32.gmra.mrb[0].mxu0 %v1200
    %v1429 = vpop.f32.mrb[0].mxu0
    %v1430 = vadd.f32 %v1226, %v1429
    %v1431 = vpop.f32.mrb[0].mxu0
    %1432 = vmatprep.mubr.f32.mxu0 0.0
    %1433 = vmatmul.mubr.f32.gmra.mrb[0].mxu0 %v1201
    %v1434 = vpop.f32.mrb[0].mxu0
    %v1435 = vadd.f32 %v1226, %v1434
    %v1436 = vpop.f32.mrb[0].mxu0
    %1437 = vmatprep.mubr.f32.mxu0 0.0
    %1438 = vmatmul.mubr.f32.gmra.mrb[0].mxu0 %v1202
    %v1439 = vpop.f32.mrb[0].mxu0
    %v1440 = vadd.f32 %v1226, %v1439
    %v1441 = vpop.f32.mrb[0].mxu0
    %1442 = vmatprep.mubr.f32.mxu0 0.0
    %1443 = vmatmul.mubr.f32.gmra.mrb[0].mxu0 %v1203
    %v1444 = vpop.f32.mrb[0].mxu0
    %v1445 = vadd.f32 %v1226, %v1444
    %v1446 = vpop.f32.mrb[0].mxu0
    %1447 = vmatprep.mubr.f32.mxu0 0.0
    %1448 = vmatmul.mubr.f32.gmra.mrb[0].mxu0 %v1204
    %v1449 = vpop.f32.mrb[0].mxu0
    %v1450 = vadd.f32 %v1226, %v1449
    %v1451 = vpop.f32.mrb[0].mxu0
    %1452 = vdwg.mxu0
    %1453 = vst [vmem:[#allocation2] sm:$0xff] %v1295
    %1454 = vst [vmem:[#allocation2 + $0x8] sm:$0xff] %v1300
    %1455 = vst [vmem:[#allocation2 + $0x10] sm:$0xff] %v1305
    %1456 = vst [vmem:[#allocation2 + $0x18] sm:$0xff] %v1310
    %1457 = vst [vmem:[#allocation2 + $0x20] sm:$0xff] %v1315
    %1458 = vst [vmem:[#allocation2 + $0x28] sm:$0xff] %v1320
    %1459 = vst [vmem:[#allocation2 + $0x30] sm:$0xff] %v1325
    %1460 = vst [vmem:[#allocation2 + $0x38] sm:$0xff] %v1330
    %1461 = vst [vmem:[#allocation2 + $0x40] sm:$0xff] %v1335
    %1462 = vst [vmem:[#allocation2 + $0x48] sm:$0xff] %v1340
    %1463 = vst [vmem:[#allocation2 + $0x50] sm:$0xff] %v1345
    %1464 = vst [vmem:[#allocation2 + $0x58] sm:$0xff] %v1350
    %1465 = vst [vmem:[#allocation2 + $0x60] sm:$0xff] %v1355
    %1466 = vst [vmem:[#allocation2 + $0x68] sm:$0xff] %v1360
    %1467 = vst [vmem:[#allocation2 + $0x70] sm:$0xff] %v1365
    %1468 = vst [vmem:[#allocation2 + $0x78] sm:$0xff] %v1370
    %1469 = vst [vmem:[#allocation2 + $0x80] sm:$0xff] %v1375
    %1470 = vst [vmem:[#allocation2 + $0x88] sm:$0xff] %v1380
    %1471 = vst [vmem:[#allocation2 + $0x90] sm:$0xff] %v1385
    %1472 = vst [vmem:[#allocation2 + $0x98] sm:$0xff] %v1390
    %1473 = vst [vmem:[#allocation2 + $0xa0] sm:$0xff] %v1395
    %1474 = vst [vmem:[#allocation2 + $0xa8] sm:$0xff] %v1400
    %1475 = vst [vmem:[#allocation2 + $0xb0] sm:$0xff] %v1405
    %1476 = vst [vmem:[#allocation2 + $0xb8] sm:$0xff] %v1410
    %1477 = vst [vmem:[#allocation2 + $0xc0] sm:$0xff] %v1415
    %1478 = vst [vmem:[#allocation2 + $0xc8] sm:$0xff] %v1420
    %1479 = vst [vmem:[#allocation2 + $0xd0] sm:$0xff] %v1425
    %1480 = vst [vmem:[#allocation2 + $0xd8] sm:$0xff] %v1430
    %1481 = vst [vmem:[#allocation2 + $0xe0] sm:$0xff] %v1435
    %1482 = vst [vmem:[#allocation2 + $0xe8] sm:$0xff] %v1440
    %1483 = vst [vmem:[#allocation2 + $0xf0] sm:$0xff] %v1445
    %1484 = vst [vmem:[#allocation2 + $0xf8] sm:$0xff] %v1450
    // Predicated region
    $region22: #{tpu_custom_call.1} parent=1 // pred_check
      _
    $region23: #{tpu_custom_call.1} parent=1 // pred_check_branch
      %1486 = sbr.rel (0) target = $region25
    $region24: #{tpu_custom_call.1} parent=1 // pred_region
      %s1488 = ssub.s32 4096, 4096
      %1489 = vsyncadd [#allocation3], %s1488
      %s1490 = sshll.u32 [#allocation2], 4
      %s1491 = int_to_ptr.vmem [resolvable:$true] %s1490
      %1496 = dma.vmem_to_hbm [thread:$0]  %s1491, 4096, %s5, [#allocation3], 128, 128, 8
    $region25: #{tpu_custom_call.1} parent=1 // pred_fallthru
      _
    // Predicated region
    $region26: #{tpu_custom_call.1} parent=1 // pred_check
      _
    $region27: #{tpu_custom_call.1} parent=1 // pred_check_branch
      %1498 = sbr.rel (0) target = $region29
    $region28: #{tpu_custom_call.1} parent=1 // pred_region
      %1499 = dma.done [#allocation3], 4096
    $region29: #{tpu_custom_call.1} parent=1 // pred_fallthru
      _
    %1500 = vsyncpa [#allocation3], 1

</llo_original>
